<compile_context>
chip_gen: v5e
topology: v5e:2x2
jax: 0.10.0
libtpu: 0.0.40
codegen_flags: <defaults>
</compile_context>

<pallas_src>
import functools

import jax
import jax.numpy as jnp
from jax import lax
from jax.experimental import pallas as pl
from jax.experimental.pallas import tpu as pltpu


# ----------------------------------------------------------------------------
# generation-aware sizing
# ----------------------------------------------------------------------------
def _phys_vmem_bytes():
    try:
        v = getattr(pltpu.get_tpu_info(), "vmem_capacity_bytes", None)
        if v:
            return int(v)
    except Exception:
        pass
    return 64 * 1024 * 1024            # conservative default == v7x per-core VMEM


def _bf16_epilogue_ok():
    """v6e / v7x have bf16 VPU + EUP; v5e (and older) do not."""
    try:
        kind = jax.devices()[0].device_kind.lower()
    except Exception:
        return False
    return any(tag in kind for tag in ("v6", "v7", "7x"))


_PHYS_VMEM = _phys_vmem_bytes()
# Leave headroom for Mosaic internal scratch + double-buffered BlockSpec windows.
_VMEM_LIMIT = min(_PHYS_VMEM * 3 // 4, 112 * 1024 * 1024)     # ~48 MiB v7x, 96 MiB v5e/v6e
_DEFAULT_TM = 1024 if _PHYS_VMEM >= 100 * 1024 * 1024 else 512
_BF16_EPILOGUE = _bf16_epilogue_ok()

# Left halo pad (in the W / sublane dim) of the padded scratch.  16 keeps the
# DMA destination window aligned to the (8,128) f32 and (16,128) bf16 tiles.
_LPAD = 16


# ----------------------------------------------------------------------------
# helpers (mirror the PyTorch module's __init__ logic)
# ----------------------------------------------------------------------------
def make_divisible_by_8(v):
    new_v = max(8, int(v + 4) // 8 * 8)
    if new_v < 0.9 * v:
        new_v += 8
    return new_v


def bn_fold(gamma, beta, mean, var, eps=1e-5):
    """Fold eval-mode BatchNorm into per-channel scale/shift."""
    scale = gamma / jnp.sqrt(var + eps)
    shift = beta - mean * scale
    return scale, shift


def _sds(start, size, stride):
    """(Possibly strided) slice for ref indexing."""
    return pl.ds(start, size) if stride == 1 else pl.ds(start, size, stride=stride)


def _epilogue_dtype(storage_dtype):
    """bf16 epilogue only when the data is bf16 AND the chip has a bf16 VPU."""
    if storage_dtype == jnp.bfloat16 and _BF16_EPILOGUE:
        return jnp.bfloat16
    return jnp.float32


# ----------------------------------------------------------------------------
# Pallas kernels
# ----------------------------------------------------------------------------
def _pw_conv_bn_kernel(x_ref, w_ref, scale_ref, shift_ref, *rest,
                       act, has_res, ep_dtype):
    """1x1 conv (MXU matmul, f32 accumulate) + folded BN (+SiLU) (+residual).

    Blocks: x (tm, Cin) | w (Cin, Cout) | scale/shift (1, Cout) [res (tm, Cout)]
            -> o (tm, Cout).
    Any per-batch SE scale has already been folded into `w` by the wrapper, so
    there is no extra cast/mul on the hot path.  The epilogue runs in bf16 on
    v6e/v7x (bf16 VPU/EUP) and f32 on v5e.
    """
    res_ref = rest[0] if has_res else None
    o_ref = rest[-1]
    y = jnp.dot(x_ref[...], w_ref[...], preferred_element_type=jnp.float32)
    y = y.astype(ep_dtype) * scale_ref[...].astype(ep_dtype) \
        + shift_ref[...].astype(ep_dtype)
    if act:
        y = y * jax.nn.sigmoid(y)                     # SiLU
    if has_res:
        y = y + res_ref[...].astype(ep_dtype)
    o_ref[...] = y.astype(o_ref.dtype)


def _fill_padded_scratch(x_ref, xpad_ref, dma_sem, *, H, W):
    """DMA the (H, W, tc) input block into the zero-haloed VMEM scratch.

    The interior copy rides the DMA engine (not the vld/vst slots); only the
    four thin halo strips are written with vector stores while the DMA is in
    flight.  The interior lands at column offset _LPAD so the DMA window is
    tile-aligned; the zero strips / tap reads use the (unaligned) static
    offsets _LPAD-1 .. _LPAD+W.
    """
    tc = xpad_ref.shape[-1]
    Wp = xpad_ref.shape[1]
    cp = pltpu.make_async_copy(
        x_ref, xpad_ref.at[pl.ds(1, H), pl.ds(_LPAD, W), :], dma_sem)
    cp.start()
    zrow = jnp.zeros((1, Wp, tc), xpad_ref.dtype)
    zcol = jnp.zeros((H + 2, 1, tc), xpad_ref.dtype)
    xpad_ref[0:1, :, :] = zrow                          # top halo row
    xpad_ref[H + 1:H + 2, :, :] = zrow                  # bottom halo row
    xpad_ref[:, _LPAD - 1:_LPAD, :] = zcol              # left halo column
    xpad_ref[:, _LPAD + W:_LPAD + W + 1, :] = zcol      # right halo column
    cp.wait()
    # TODO(synk): for very large H*W feature maps, switch to overlapping-halo
    # row tiles fetched by manual DMA to bound the scratch further on v7x.


def _dw_conv_bn_silu_kernel(x_ref, w_ref, scale_ref, shift_ref, o_ref, pool_ref,
                            xpad_ref, dma_sem, *, stride, H, W, Ho, Wo, tho):
    """Depthwise 3x3 conv (pad=1) + BN + SiLU for one (batch, channel-tile).

    The SE global-average pool is fused in as a second (1, tc) output so the
    hidden feature map is never re-read just to be pooled.
    """
    f32 = jnp.float32
    tc = xpad_ref.shape[-1]
    c0 = _LPAD - 1                                      # padded column 0

    _fill_padded_scratch(x_ref, xpad_ref, dma_sem, H=H, W=W)

    w = w_ref[...].astype(f32)                          # (3, 3, tc)
    scale = scale_ref[...].astype(f32).reshape(1, 1, tc)
    shift = shift_ref[...].astype(f32).reshape(1, 1, tc)

    def chunk(r0, rows, pool):
        acc = jnp.zeros((rows, Wo, tc), f32)
        for dh in range(3):
            for dw in range(3):
                patch = xpad_ref[_sds(r0 * stride + dh, rows, stride),
                                 _sds(c0 + dw, Wo, stride), :]
                acc = acc + patch.astype(f32) * w[dh, dw]
        y = acc * scale + shift
        y = y * jax.nn.sigmoid(y)                       # SiLU (f32: pool accuracy)
        o_ref[pl.ds(r0, rows)] = y.astype(o_ref.dtype)
        return pool + jnp.sum(y, axis=(0, 1)).reshape(1, tc)

    pool = jnp.zeros((1, tc), f32)
    n_chunks = pl.cdiv(Ho, tho)
    if stride == 1 and n_chunks > 1 and Ho % tho == 0:
        # Uniform chunks: a rolled fori_loop keeps code size bounded for large
        # feature maps instead of a Python unroll of n_chunks x 9 taps.
        pool = lax.fori_loop(0, n_chunks,
                             lambda i, c: chunk(i * tho, tho, c), pool, unroll=2)
    else:
        for r0 in range(0, Ho, tho):                    # few static row chunks
            pool = chunk(r0, min(tho, Ho - r0), pool)
    pool_ref[...] = pool * (1.0 / (Ho * Wo))            # fused SE avg-pool


def _conv3x3_bn_silu_kernel(x_ref, w_ref, scale_ref, shift_ref, o_ref,
                            xpad_ref, dma_sem,
                            *, stride, H, W, Ho, Wo, tho, lane_aligned, ep_dtype):
    """Full 3x3 conv (pad=1) + BN + SiLU.

    lane_aligned (Cin % 128 == 0): im2col lane-concat -> one K=9*Cin matmul.
    Otherwise: 9 K=Cin matmuls accumulated in f32 (avoids the XLU lane rotates
    a misaligned lane concat would trigger).
    The padded scratch is filled only once per batch (co tile 0); the x block
    is constant across co so Pallas does not re-DMA it either.
    """
    f32 = jnp.float32
    Cin = x_ref.shape[-1]
    c0 = _LPAD - 1

    @pl.when(pl.program_id(1) == 0)
    def _():
        _fill_padded_scratch(x_ref, xpad_ref, dma_sem, H=H, W=W)

    w = w_ref[...]                                      # (9*Cin, Cout_tile)
    scale = scale_ref[...].astype(ep_dtype)
    shift = shift_ref[...].astype(ep_dtype)

    for r0 in range(0, Ho, tho):                        # static row chunks
        rows = min(tho, Ho - r0)
        taps = [xpad_ref[_sds(r0 * stride + dh, rows, stride),
                         _sds(c0 + dw, Wo, stride), :]
                for dh in range(3) for dw in range(3)]
        if lane_aligned:
            patch = jnp.concatenate(taps, axis=-1).reshape(rows * Wo, 9 * Cin)
            y = jnp.dot(patch, w, preferred_element_type=f32)     # K = 9*Cin
        else:
            y = jnp.zeros((rows * Wo, w.shape[-1]), f32)
            for t, tap in enumerate(taps):
                y = y + jnp.dot(tap.reshape(rows * Wo, Cin),
                                w[t * Cin:(t + 1) * Cin, :],
                                preferred_element_type=f32)
        y = y.astype(ep_dtype) * scale + shift
        y = y * jax.nn.sigmoid(y)
        o_ref[r0:r0 + rows] = y.reshape(rows, Wo, -1).astype(o_ref.dtype)


# ----------------------------------------------------------------------------
# wrappers around pallas_call
# ----------------------------------------------------------------------------
def pointwise_conv_bn(x, w, scale, shift, *, act, residual=None, tm=None):
    """x: (R, Cin) flattened rows; w: (Cin, Cout) -> (R, Cout)."""
    R, Cin = x.shape
    Cout = w.shape[-1]
    tm = min(tm or _DEFAULT_TM, R)
    grid = (pl.cdiv(R, tm),)

    # TODO(synk): pipeline_mode=pl.Buffered(1) on the constant w/scale/shift
    # blocks would single-buffer them and save a little VMEM (helps v7x most).
    in_specs = [
        pl.BlockSpec((tm, Cin), lambda i: (i, 0)),
        pl.BlockSpec((Cin, Cout), lambda i: (0, 0)),
        pl.BlockSpec((1, Cout), lambda i: (0, 0)),
        pl.BlockSpec((1, Cout), lambda i: (0, 0)),
    ]
    args = [x, w, scale.reshape(1, -1).astype(jnp.float32),
            shift.reshape(1, -1).astype(jnp.float32)]
    if residual is not None:
        in_specs.append(pl.BlockSpec((tm, Cout), lambda i: (i, 0)))
        args.append(residual)

    kernel = functools.partial(_pw_conv_bn_kernel, act=act,
                               has_res=residual is not None,
                               ep_dtype=_epilogue_dtype(x.dtype))
    return pl.pallas_call(
        kernel,
        out_shape=jax.ShapeDtypeStruct((R, Cout), x.dtype),
        grid=grid,
        in_specs=in_specs,
        out_specs=pl.BlockSpec((tm, Cout), lambda i: (i, 0)),
        compiler_params=pltpu.CompilerParams(
            dimension_semantics=("parallel",),
            vmem_limit_bytes=_VMEM_LIMIT),
    )(*args)


def pointwise_conv_bn_batched_w(x, w_b, scale, shift, *, act, residual=None, tm=None):
    """x: (B, M, Cin); w_b: (B, Cin, Cout) per-batch weight (SE scale folded in)."""
    B, M, Cin = x.shape
    Cout = w_b.shape[-1]
    tm = min(tm or _DEFAULT_TM, M)
    grid = (B, pl.cdiv(M, tm))

    in_specs = [
        pl.BlockSpec((None, tm, Cin), lambda b, m: (b, m, 0)),
        pl.BlockSpec((None, Cin, Cout), lambda b, m: (b, 0, 0)),
        pl.BlockSpec((1, Cout), lambda b, m: (0, 0)),
        pl.BlockSpec((1, Cout), lambda b, m: (0, 0)),
    ]
    args = [x, w_b, scale.reshape(1, -1).astype(jnp.float32),
            shift.reshape(1, -1).astype(jnp.float32)]
    if residual is not None:
        in_specs.append(pl.BlockSpec((None, tm, Cout), lambda b, m: (b, m, 0)))
        args.append(residual)

    kernel = functools.partial(_pw_conv_bn_kernel, act=act,
                               has_res=residual is not None,
                               ep_dtype=_epilogue_dtype(x.dtype))
    return pl.pallas_call(
        kernel,
        out_shape=jax.ShapeDtypeStruct((B, M, Cout), x.dtype),
        grid=grid,
        in_specs=in_specs,
        out_specs=pl.BlockSpec((None, tm, Cout), lambda b, m: (b, m, 0)),
        compiler_params=pltpu.CompilerParams(
            dimension_semantics=("parallel", "parallel"),
            vmem_limit_bytes=_VMEM_LIMIT),
    )(*args)


def depthwise_conv_bn_silu(x, w_dw, scale, shift, *, stride):
    """x: (B, H, W, C); w_dw: (3, 3, C).  Returns (y, pooled_mean (B, C))."""
    B, H, W, C = x.shape
    Ho = (H - 1) // stride + 1
    Wo = (W - 1) // stride + 1
    # 128-wide channel tiles with a ragged last tile: garbage lanes never mix
    # across channels and OOB writes of y / pool are masked by Pallas.
    tc = min(128, C)
    n_ct = pl.cdiv(C, tc)
    # Row-chunk budget: ~32K f32 accumulator elements per chunk.
    tho = max(1, min(Ho, 32768 // max(1, Wo * tc)))

    kernel = functools.partial(_dw_conv_bn_silu_kernel, stride=stride,
                               H=H, W=W, Ho=Ho, Wo=Wo, tho=tho)
    out, pooled = pl.pallas_call(
        kernel,
        out_shape=(jax.ShapeDtypeStruct((B, Ho, Wo, C), x.dtype),
                   jax.ShapeDtypeStruct((B, 1, C), jnp.float32)),
        grid=(B, n_ct),
        in_specs=[
            pl.BlockSpec((None, H, W, tc), lambda b, c: (b, 0, 0, c)),
            pl.BlockSpec((3, 3, tc), lambda b, c: (0, 0, c)),
            pl.BlockSpec((1, tc), lambda b, c: (0, c)),
            pl.BlockSpec((1, tc), lambda b, c: (0, c)),
        ],
        out_specs=(pl.BlockSpec((None, Ho, Wo, tc), lambda b, c: (b, 0, 0, c)),
                   pl.BlockSpec((None, 1, tc), lambda b, c: (b, 0, c))),
        scratch_shapes=[pltpu.VMEM((H + 2, _LPAD + W + 1, tc), x.dtype),
                        pltpu.SemaphoreType.DMA(())],
        compiler_params=pltpu.CompilerParams(
            dimension_semantics=("parallel", "parallel"),
            vmem_limit_bytes=_VMEM_LIMIT),
    )(x, w_dw, scale.reshape(1, -1).astype(jnp.float32),
      shift.reshape(1, -1).astype(jnp.float32))
    return out, pooled.reshape(B, C)


def conv3x3_bn_silu(x, w, scale, shift, *, stride):
    """x: (B, H, W, Cin); w: (3, 3, Cin, Cout) -> (B, Ho, Wo, Cout)."""
    B, H, W, Cin = x.shape
    Cout = w.shape[-1]
    Ho = (H - 1) // stride + 1
    Wo = (W - 1) // stride + 1
    w2 = w.reshape(9 * Cin, Cout)                      # tap-major im2col weight layout
    tco = min(128, Cout)                               # output-channel tiling
    n_co = pl.cdiv(Cout, tco)
    tho = max(1, min(Ho, 512 // max(1, Wo)))

    kernel = functools.partial(_conv3x3_bn_silu_kernel, stride=stride,
                               H=H, W=W, Ho=Ho, Wo=Wo, tho=tho,
                               lane_aligned=(Cin % 128 == 0),
                               ep_dtype=_epilogue_dtype(x.dtype))
    return pl.pallas_call(
        kernel,
        out_shape=jax.ShapeDtypeStruct((B, Ho, Wo, Cout), x.dtype),
        grid=(B, n_co),
        in_specs=[
            pl.BlockSpec((None, H, W, Cin), lambda b, co: (b, 0, 0, 0)),
            pl.BlockSpec((9 * Cin, tco), lambda b, co: (0, co)),
            pl.BlockSpec((1, tco), lambda b, co: (0, co)),
            pl.BlockSpec((1, tco), lambda b, co: (0, co)),
        ],
        out_specs=pl.BlockSpec((None, Ho, Wo, tco), lambda b, co: (b, 0, 0, co)),
        scratch_shapes=[pltpu.VMEM((H + 2, _LPAD + W + 1, Cin), x.dtype),
                        pltpu.SemaphoreType.DMA(())],
        # NOTE: co must stay "arbitrary" (never megacore-split): the padded
        # scratch is filled only at co == 0 and reused across co tiles.
        # TODO(synk): for B=1 on v7x (2 TCs) this leaves one core idle; a
        # core-split row axis would need per-core scratch fills.
        compiler_params=pltpu.CompilerParams(
            dimension_semantics=("parallel", "arbitrary"),
            vmem_limit_bytes=_VMEM_LIMIT),
    )(x, w2, scale.reshape(1, -1).astype(jnp.float32),
      shift.reshape(1, -1).astype(jnp.float32))


# ----------------------------------------------------------------------------
# MBConv forward (glue in plain JAX, hot paths in Pallas)
# ----------------------------------------------------------------------------
def mbconv_forward(x_nchw, p, *, stride, use_se, inp, oup):
    use_res = (stride == 1) and (inp == oup)
    x = jnp.transpose(x_nchw, (0, 2, 3, 1))            # NCHW -> NHWC
    B, H, W, Cin = x.shape
    s3, t3 = bn_fold(*p["bn3"])

    if use_se:
        hidden = p["w_exp"].shape[1]
        s1, t1 = bn_fold(*p["bn1"])
        s2, t2 = bn_fold(*p["bn2"])
        # 1x1 expand + BN + SiLU: flatten batch into the row axis -> full MXU tiles.
        h = pointwise_conv_bn(x.reshape(B * H * W, Cin), p["w_exp"], s1, t1, act=True)
        h = h.reshape(B, H, W, hidden)
        # depthwise 3x3 + BN + SiLU; SE global-average pool fused as 2nd output.
        h, pooled = depthwise_conv_bn_silu(h, p["w_dw"], s2, t2, stride=stride)
        Bo, Ho, Wo, _ = h.shape
        # Tiny SE MLP on the (B, hidden) pooled vector: negligible work, plain JAX.
        z = pooled @ p["se_w1"].astype(jnp.float32) + p["se_b1"]
        z = z * jax.nn.sigmoid(z)                       # SiLU
        se = jax.nn.sigmoid(z @ p["se_w2"].astype(jnp.float32) + p["se_b2"])
        # Fold per-batch SE scale into the projection weight (tiny XLA op) so the
        # projection kernel's hot path has no extra cast/mul.
        w_b = (se[:, :, None] * p["w_proj"].astype(jnp.float32)[None]).astype(h.dtype)
        res = x.reshape(B, H * W, Cin) if use_res else None
        out = pointwise_conv_bn_batched_w(h.reshape(Bo, Ho * Wo, hidden), w_b, s3, t3,
                                          act=False, residual=res)
        out = out.reshape(Bo, Ho, Wo, oup)
    else:
        hidden = p["w1"].shape[-1]
        s1, t1 = bn_fold(*p["bn1"])
        # full 3x3 conv + BN + SiLU
        h = conv3x3_bn_silu(x, p["w1"], s1, t1, stride=stride)
        Bo, Ho, Wo, _ = h.shape
        res = x.reshape(B * H * W, Cin) if use_res else None
        out = pointwise_conv_bn(h.reshape(Bo * Ho * Wo, hidden), p["w_proj"], s3, t3,
                                act=False, residual=res)
        out = out.reshape(Bo, Ho, Wo, oup)

    return jnp.transpose(out, (0, 3, 1, 2))             # NHWC -> NCHW


# ----------------------------------------------------------------------------
# deterministic parameter init (synthetic; weight layouts documented inline)
# ----------------------------------------------------------------------------
def init_params(key, inp, oup, expand_ratio, use_se):
    hidden = round(inp * expand_ratio)
    mid = make_divisible_by_8(inp // 4)
    keys = iter(jax.random.split(key, 32))
    nrm = lambda shape, s=0.1: s * jax.random.normal(next(keys), shape, jnp.float32)

    def bn(c):
        gamma = 1.0 + nrm((c,))
        beta = nrm((c,))
        mean = nrm((c,))
        var = 0.5 + jnp.abs(nrm((c,), 0.2))
        return (gamma, beta, mean, var)

    p = {}
    if use_se:
        p["w_exp"] = nrm((inp, hidden))          # torch Conv2d [hid,inp,1,1] transposed
        p["bn1"] = bn(hidden)
        p["w_dw"] = nrm((3, 3, hidden))          # torch [hid,1,3,3] -> (3,3,hid)
        p["bn2"] = bn(hidden)
        p["se_w1"] = nrm((hidden, mid))          # torch Linear [mid,hid] transposed
        p["se_b1"] = nrm((mid,))
        p["se_w2"] = nrm((mid, hidden))
        p["se_b2"] = nrm((hidden,))
        p["w_proj"] = nrm((hidden, oup))
        p["bn3"] = bn(oup)
    else:
        p["w1"] = nrm((3, 3, inp, hidden))       # torch [hid,inp,3,3] -> (3,3,inp,hid)
        p["bn1"] = bn(hidden)
        p["w_proj"] = nrm((hidden, oup))
        p["bn3"] = bn(oup)
    return p


def cast_params_bf16(p):
    """Cast conv weights to bf16 (MXU path); BN stats / SE MLP stay f32."""
    q = dict(p)
    for k in ("w_exp", "w_dw", "w_proj", "w1"):
        if k in q:
            q[k] = q[k].astype(jnp.bfloat16)
    return q


# ----------------------------------------------------------------------------
# pure-JAX reference (mirrors the PyTorch forward, eval-mode BN)
# ----------------------------------------------------------------------------
def ref_mbconv(x_nchw, p, *, stride, use_se, inp, oup):
    eps = 1e-5
    silu = lambda y: y * jax.nn.sigmoid(y)
    bn = lambda y, g, b, m, v: (y - m) / jnp.sqrt(v + eps) * g + b
    x = jnp.transpose(x_nchw, (0, 2, 3, 1))
    B, H, W, _ = x.shape
    Ho = (H - 1) // stride + 1
    Wo = (W - 1) // stride + 1

    def conv3x3(inp_, w, depthwise):
        xp = jnp.pad(inp_, ((0, 0), (1, 1), (1, 1), (0, 0)))
        acc = 0.0
        for dh in range(3):
            for dw in range(3):
                patch = xp[:, dh:dh + stride * (Ho - 1) + 1:stride,
                           dw:dw + stride * (Wo - 1) + 1:stride, :]
                if depthwise:
                    acc = acc + patch * w[dh, dw]
                else:
                    acc = acc + jnp.einsum("bhwc,cd->bhwd", patch, w[dh, dw])
        return acc

    if use_se:
        h = silu(bn(jnp.einsum("bhwc,cd->bhwd", x, p["w_exp"]), *p["bn1"]))
        h = silu(bn(conv3x3(h, p["w_dw"], True), *p["bn2"]))
        y = jnp.mean(h, axis=(1, 2))
        y = silu(y @ p["se_w1"] + p["se_b1"])
        y = jax.nn.sigmoid(y @ p["se_w2"] + p["se_b2"])
        h = h * y[:, None, None, :]
        out = bn(jnp.einsum("bhwc,cd->bhwd", h, p["w_proj"]), *p["bn3"])
    else:
        h = silu(bn(conv3x3(x, p["w1"], False), *p["bn1"]))
        out = bn(jnp.einsum("bhwc,cd->bhwd", h, p["w_proj"]), *p["bn3"])

    if stride == 1 and inp == oup:
        out = out + x
    return jnp.transpose(out, (0, 3, 1, 2))


# ----------------------------------------------------------------------------
if __name__ == "__main__":
    B, H, W = 2, 16, 16
    expand_ratio = 4

    configs = [
        # (inp, oup, stride, use_se) -- stride=1 & inp==oup exercises the residual
        (8, 8, 1, True),
        (8, 8, 1, False),
        (8, 16, 2, True),
        (8, 16, 2, False),
    ]
    for inp, oup, stride, use_se in configs:
        x = jax.random.normal(jax.random.PRNGKey(0), (B, inp, H, W), jnp.float32)
        params = init_params(jax.random.PRNGKey(1), inp, oup, expand_ratio, use_se)
        out = mbconv_forward(x, params, stride=stride, use_se=use_se, inp=inp, oup=oup)
        out = jax.block_until_ready(out)
        ref = ref_mbconv(x, params, stride=stride, use_se=use_se, inp=inp, oup=oup)
        Ho = (H - 1) // stride + 1
        Wo = (W - 1) // stride + 1
        assert out.shape == ref.shape == (B, oup, Ho, Wo)
        err = float(jnp.max(jnp.abs(out - ref)))
        assert err < 2e-4, f"cfg={(inp, oup, stride, use_se)} f32 max abs err {err}"

    # bf16 activations / conv weights (bf16 epilogue on v6e/v7x, f32 on v5e),
    # compared against the f32 reference -> loose tolerance.
    inp, oup, stride, use_se = 8, 8, 1, True
    x = jax.random.normal(jax.random.PRNGKey(0), (B, inp, H, W), jnp.float32)
    params = init_params(jax.random.PRNGKey(1), inp, oup, expand_ratio, use_se)
    out_bf16 = mbconv_forward(x.astype(jnp.bfloat16), cast_params_bf16(params),
                              stride=stride, use_se=use_se, inp=inp, oup=oup)
    out_bf16 = jax.block_until_ready(out_bf16)
    ref = ref_mbconv(x, params, stride=stride, use_se=use_se, inp=inp, oup=oup)
    err = float(jnp.max(jnp.abs(out_bf16.astype(jnp.float32) - ref)))
    assert err < 2e-1, f"bf16 max abs err {err}"

    print("KERNEL_OK")
</pallas_src>

<mosaic_0001>
module attributes {stable_mosaic.version = 11 : i64} {
  func.func @_pw_conv_bn_kernel(%arg0: i32, %arg1: memref<512x8xf32, #tpu.memory_space<vmem>>, %arg2: memref<8x32xf32, #tpu.memory_space<vmem>>, %arg3: memref<1x32xf32, #tpu.memory_space<vmem>>, %arg4: memref<1x32xf32, #tpu.memory_space<vmem>>, %arg5: memref<512x32xf32, #tpu.memory_space<vmem>>) attributes {dimension_semantics = [#tpu.dimension_semantics<parallel>], iteration_bounds = array<i64: 1>, scalar_prefetch = 0 : i64, scratch_operands = 0 : i64, tpu.core_type = #tpu.core_type<tc>, window_params = [{transform_indices = @transform_0, window_bounds = array<i64: 512, 8>}, {pipeline_mode = #tpu.pipeline_mode<synchronous>, transform_indices = @transform_1, window_bounds = array<i64: 8, 32>}, {pipeline_mode = #tpu.pipeline_mode<synchronous>, transform_indices = @transform_2, window_bounds = array<i64: 1, 32>}, {pipeline_mode = #tpu.pipeline_mode<synchronous>, transform_indices = @transform_3, window_bounds = array<i64: 1, 32>}, {transform_indices = @transform_4, window_bounds = array<i64: 512, 32>}]} {
    %c0 = arith.constant 0 : index
    %c0_0 = arith.constant 0 : index
    %0 = vector.load %arg1[%c0, %c0_0] : memref<512x8xf32, #tpu.memory_space<vmem>>, vector<512x8xf32>
    %c0_1 = arith.constant 0 : index
    %c0_2 = arith.constant 0 : index
    %1 = vector.load %arg2[%c0_1, %c0_2] : memref<8x32xf32, #tpu.memory_space<vmem>>, vector<8x32xf32>
    %cst = arith.constant dense<0.000000e+00> : vector<512x32xf32>
    %2 = tpu.matmul %0, %1, %cst {dimension_numbers = #tpu.dot_dimension_numbers<[1], [0], [0], [1], [0, 0, 1, 1], [], []>} : vector<512x8xf32>, vector<8x32xf32>, vector<512x32xf32> -> vector<512x32xf32>
    %c0_3 = arith.constant 0 : index
    %c0_4 = arith.constant 0 : index
    %3 = vector.load %arg3[%c0_3, %c0_4] : memref<1x32xf32, #tpu.memory_space<vmem>>, vector<1x32xf32>
    %4 = vector.broadcast %3 : vector<1x32xf32> to vector<512x32xf32>
    %5 = arith.mulf %2, %4 : vector<512x32xf32>
    %c0_5 = arith.constant 0 : index
    %c0_6 = arith.constant 0 : index
    %6 = vector.load %arg4[%c0_5, %c0_6] : memref<1x32xf32, #tpu.memory_space<vmem>>, vector<1x32xf32>
    %7 = vector.broadcast %6 : vector<1x32xf32> to vector<512x32xf32>
    %8 = arith.addf %5, %7 : vector<512x32xf32>
    %9 = arith.negf %8 : vector<512x32xf32>
    %10 = math.exp %9 : vector<512x32xf32>
    %cst_7 = arith.constant 1.000000e+00 : f32
    %11 = vector.broadcast %cst_7 : f32 to vector<512x32xf32>
    %12 = arith.addf %11, %10 : vector<512x32xf32>
    %13 = arith.divf %11, %12 : vector<512x32xf32>
    %14 = arith.mulf %8, %13 : vector<512x32xf32>
    %c0_8 = arith.constant 0 : index
    %c0_9 = arith.constant 0 : index
    %15 = vector.load %arg5[%c0_8, %c0_9] : memref<512x32xf32, #tpu.memory_space<vmem>>, vector<512x32xf32>
    tpu.vector_store %arg5[%c0_8, %c0_9], %14 {strides = array<i32>} : memref<512x32xf32, #tpu.memory_space<vmem>>, vector<512x32xf32>,
    return
  }
  func.func @transform_0(%arg0: i32) -> (i32, i32) {
    %c0_i32 = arith.constant 0 : i32
    %c0_i32_0 = arith.constant 0 : i32
    return %arg0, %c0_i32 : i32, i32
  }
  func.func @transform_1(%arg0: i32) -> (i32, i32) {
    %c0_i32 = arith.constant 0 : i32
    %c0_i32_0 = arith.constant 0 : i32
    %c0_i32_1 = arith.constant 0 : i32
    return %c0_i32, %c0_i32_0 : i32, i32
  }
  func.func @transform_2(%arg0: i32) -> (i32, i32) {
    %c0_i32 = arith.constant 0 : i32
    %c0_i32_0 = arith.constant 0 : i32
    %c0_i32_1 = arith.constant 0 : i32
    return %c0_i32, %c0_i32_0 : i32, i32
  }
  func.func @transform_3(%arg0: i32) -> (i32, i32) {
    %c0_i32 = arith.constant 0 : i32
    %c0_i32_0 = arith.constant 0 : i32
    %c0_i32_1 = arith.constant 0 : i32
    return %c0_i32, %c0_i32_0 : i32, i32
  }
  func.func @transform_4(%arg0: i32) -> (i32, i32) {
    %c0_i32 = arith.constant 0 : i32
    %c0_i32_0 = arith.constant 0 : i32
    return %arg0, %c0_i32 : i32, i32
  }
}

</mosaic_0001>

<llo_original>
// kernel: tpu_custom_call.1
$region0: #{tpu_custom_call.1}
  #allocation0 [shape = 'u32[]', space=smem, size = 0x4, offset = 0x4, fixed_abs, tag = 'smem constant byte address 0x4 - core index']
  #allocation1 [shape = 'u32[72,128]{1,0:T(1,128)}', space=vmem, size = 0x9000, scoped, tag = 'internal scratch']
  %s0 = inlined_call_operand.vmem [shape: f32[512,8], index: 0, kind: input, shape index: {}]
  %s1 = inlined_call_operand.vmem [shape: f32[8,32], index: 1, kind: input, shape index: {}]
  %s2 = inlined_call_operand.vmem [shape: f32[1,32], index: 2, kind: input, shape index: {}]
  %s3 = inlined_call_operand.vmem [shape: f32[1,32], index: 3, kind: input, shape index: {}]
  %s4 = inlined_call_operand.vmem [shape: f32[512,32], index: 4, kind: output, shape index: {}]
  %s5 = sld [smem:[#allocation0]]
  $region26: #{tpu_custom_call.1} parent=0
    _
  %s7 = ssub.s32 1, %s5
  %s8 = scalar_select 0, %s7, %s5
  // Predicated region
  $region2: #{tpu_custom_call.1} parent=0 // pred_check
    _
  $region3: #{tpu_custom_call.1} parent=0 // pred_check_branch
    %10 = sbr.rel (0) target = $region5
  $region4: #{tpu_custom_call.1} parent=0 // pred_region
    _
  $region5: #{tpu_custom_call.1} parent=0 // pred_fallthru
    _
  // Predicated region
  $region6: #{tpu_custom_call.1} parent=0 // pred_check
    _
  $region7: #{tpu_custom_call.1} parent=0 // pred_check_branch
    %12 = sbr.rel (0) target = $region9
  $region8: #{tpu_custom_call.1} parent=0 // pred_region
    _
  $region9: #{tpu_custom_call.1} parent=0 // pred_fallthru
    _
  // Predicated region
  $region10: #{tpu_custom_call.1} parent=0 // pred_check
    _
  $region11: #{tpu_custom_call.1} parent=0 // pred_check_branch
    %14 = sbr.rel (0) target = $region13
  $region12: #{tpu_custom_call.1} parent=0 // pred_region
    _
  $region13: #{tpu_custom_call.1} parent=0 // pred_fallthru
    _
  // Predicated region
  $region14: #{tpu_custom_call.1} parent=0 // pred_check
    _
  $region15: #{tpu_custom_call.1} parent=0 // pred_check_branch
    %16 = sbr.rel (0) target = $region17
  $region16: #{tpu_custom_call.1} parent=0 // pred_region
    _
  $region17: #{tpu_custom_call.1} parent=0 // pred_fallthru
    _
  %v17 = vld [vmem:[%s0] sm:$0xff]
  %v18 = vld [vmem:[%s0 + $0x8] sm:$0xff]
  %v19 = vld [vmem:[%s0 + $0x10] sm:$0xff]
  %v20 = vld [vmem:[%s0 + $0x18] sm:$0xff]
  %v21 = vld [vmem:[%s0 + $0x20] sm:$0xff]
  %v22 = vld [vmem:[%s0 + $0x28] sm:$0xff]
  %v23 = vld [vmem:[%s0 + $0x30] sm:$0xff]
  %v24 = vld [vmem:[%s0 + $0x38] sm:$0xff]
  %v25 = vld [vmem:[%s0 + $0x40] sm:$0xff]
  %v26 = vld [vmem:[%s0 + $0x48] sm:$0xff]
  %v27 = vld [vmem:[%s0 + $0x50] sm:$0xff]
  %v28 = vld [vmem:[%s0 + $0x58] sm:$0xff]
  %v29 = vld [vmem:[%s0 + $0x60] sm:$0xff]
  %v30 = vld [vmem:[%s0 + $0x68] sm:$0xff]
  %v31 = vld [vmem:[%s0 + $0x70] sm:$0xff]
  %v32 = vld [vmem:[%s0 + $0x78] sm:$0xff]
  %v33 = vld [vmem:[%s0 + $0x80] sm:$0xff]
  %v34 = vld [vmem:[%s0 + $0x88] sm:$0xff]
  %v35 = vld [vmem:[%s0 + $0x90] sm:$0xff]
  %v36 = vld [vmem:[%s0 + $0x98] sm:$0xff]
  %v37 = vld [vmem:[%s0 + $0xa0] sm:$0xff]
  %v38 = vld [vmem:[%s0 + $0xa8] sm:$0xff]
  %v39 = vld [vmem:[%s0 + $0xb0] sm:$0xff]
  %v40 = vld [vmem:[%s0 + $0xb8] sm:$0xff]
  %v41 = vld [vmem:[%s0 + $0xc0] sm:$0xff]
  %v42 = vld [vmem:[%s0 + $0xc8] sm:$0xff]
  %v43 = vld [vmem:[%s0 + $0xd0] sm:$0xff]
  %v44 = vld [vmem:[%s0 + $0xd8] sm:$0xff]
  %v45 = vld [vmem:[%s0 + $0xe0] sm:$0xff]
  %v46 = vld [vmem:[%s0 + $0xe8] sm:$0xff]
  %v47 = vld [vmem:[%s0 + $0xf0] sm:$0xff]
  %v48 = vld [vmem:[%s0 + $0xf8] sm:$0xff]
  %v49 = vld [vmem:[%s0 + $0x100] sm:$0xff]
  %v50 = vld [vmem:[%s0 + $0x108] sm:$0xff]
  %v51 = vld [vmem:[%s0 + $0x110] sm:$0xff]
  %v52 = vld [vmem:[%s0 + $0x118] sm:$0xff]
  %v53 = vld [vmem:[%s0 + $0x120] sm:$0xff]
  %v54 = vld [vmem:[%s0 + $0x128] sm:$0xff]
  %v55 = vld [vmem:[%s0 + $0x130] sm:$0xff]
  %v56 = vld [vmem:[%s0 + $0x138] sm:$0xff]
  %v57 = vld [vmem:[%s0 + $0x140] sm:$0xff]
  %v58 = vld [vmem:[%s0 + $0x148] sm:$0xff]
  %v59 = vld [vmem:[%s0 + $0x150] sm:$0xff]
  %v60 = vld [vmem:[%s0 + $0x158] sm:$0xff]
  %v61 = vld [vmem:[%s0 + $0x160] sm:$0xff]
  %v62 = vld [vmem:[%s0 + $0x168] sm:$0xff]
  %v63 = vld [vmem:[%s0 + $0x170] sm:$0xff]
  %v64 = vld [vmem:[%s0 + $0x178] sm:$0xff]
  %v65 = vld [vmem:[%s0 + $0x180] sm:$0xff]
  %v66 = vld [vmem:[%s0 + $0x188] sm:$0xff]
  %v67 = vld [vmem:[%s0 + $0x190] sm:$0xff]
  %v68 = vld [vmem:[%s0 + $0x198] sm:$0xff]
  %v69 = vld [vmem:[%s0 + $0x1a0] sm:$0xff]
  %v70 = vld [vmem:[%s0 + $0x1a8] sm:$0xff]
  %v71 = vld [vmem:[%s0 + $0x1b0] sm:$0xff]
  %v72 = vld [vmem:[%s0 + $0x1b8] sm:$0xff]
  %v73 = vld [vmem:[%s0 + $0x1c0] sm:$0xff]
  %v74 = vld [vmem:[%s0 + $0x1c8] sm:$0xff]
  %v75 = vld [vmem:[%s0 + $0x1d0] sm:$0xff]
  %v76 = vld [vmem:[%s0 + $0x1d8] sm:$0xff]
  %v77 = vld [vmem:[%s0 + $0x1e0] sm:$0xff]
  %v78 = vld [vmem:[%s0 + $0x1e8] sm:$0xff]
  %v79 = vld [vmem:[%s0 + $0x1f0] sm:$0xff]
  %v80 = vld [vmem:[%s0 + $0x1f8] sm:$0xff]
  %v81 = vld [vmem:[%s1] sm:$0xff]
  %vm82 = vcmask 64512
  %v84 = vsel %vm82, %v17, 0
  %v87 = vsel %vm82, %v18, 0
  %v90 = vsel %vm82, %v19, 0
  %v93 = vsel %vm82, %v20, 0
  %v96 = vsel %vm82, %v21, 0
  %v99 = vsel %vm82, %v22, 0
  %v102 = vsel %vm82, %v23, 0
  %v105 = vsel %vm82, %v24, 0
  %v108 = vsel %vm82, %v25, 0
  %v111 = vsel %vm82, %v26, 0
  %v114 = vsel %vm82, %v27, 0
  %v117 = vsel %vm82, %v28, 0
  %v120 = vsel %vm82, %v29, 0
  %v123 = vsel %vm82, %v30, 0
  %v126 = vsel %vm82, %v31, 0
  %v129 = vsel %vm82, %v32, 0
  %v132 = vsel %vm82, %v33, 0
  %v135 = vsel %vm82, %v34, 0
  %v138 = vsel %vm82, %v35, 0
  %v141 = vsel %vm82, %v36, 0
  %v144 = vsel %vm82, %v37, 0
  %v147 = vsel %vm82, %v38, 0
  %v150 = vsel %vm82, %v39, 0
  %v153 = vsel %vm82, %v40, 0
  %v156 = vsel %vm82, %v41, 0
  %v159 = vsel %vm82, %v42, 0
  %v162 = vsel %vm82, %v43, 0
  %v165 = vsel %vm82, %v44, 0
  %v168 = vsel %vm82, %v45, 0
  %v171 = vsel %vm82, %v46, 0
  %v174 = vsel %vm82, %v47, 0
  %v177 = vsel %vm82, %v48, 0
  %v180 = vsel %vm82, %v49, 0
  %v183 = vsel %vm82, %v50, 0
  %v186 = vsel %vm82, %v51, 0
  %v189 = vsel %vm82, %v52, 0
  %v192 = vsel %vm82, %v53, 0
  %v195 = vsel %vm82, %v54, 0
  %v198 = vsel %vm82, %v55, 0
  %v201 = vsel %vm82, %v56, 0
  %v204 = vsel %vm82, %v57, 0
  %v207 = vsel %vm82, %v58, 0
  %v210 = vsel %vm82, %v59, 0
  %v213 = vsel %vm82, %v60, 0
  %v216 = vsel %vm82, %v61, 0
  %v219 = vsel %vm82, %v62, 0
  %v222 = vsel %vm82, %v63, 0
  %v225 = vsel %vm82, %v64, 0
  %v228 = vsel %vm82, %v65, 0
  %v231 = vsel %vm82, %v66, 0
  %v234 = vsel %vm82, %v67, 0
  %v237 = vsel %vm82, %v68, 0
  %v240 = vsel %vm82, %v69, 0
  %v243 = vsel %vm82, %v70, 0
  %v246 = vsel %vm82, %v71, 0
  %v249 = vsel %vm82, %v72, 0
  %v252 = vsel %vm82, %v73, 0
  %v255 = vsel %vm82, %v74, 0
  %v258 = vsel %vm82, %v75, 0
  %v261 = vsel %vm82, %v76, 0
  %v264 = vsel %vm82, %v77, 0
  %v267 = vsel %vm82, %v78, 0
  %v270 = vsel %vm82, %v79, 0
  %v273 = vsel %vm82, %v80, 0
  %275 = vmatpush.msra.mxu0 0.0
  %276 = vmatpush.msra.mxu0 0.0
  %277 = vmatpush.msra.mxu0 0.0
  %278 = vmatpush.msra.mxu0 0.0
  %279 = vmatpush.msra.mxu0 0.0
  %280 = vmatpush.msra.mxu0 0.0
  %281 = vmatpush.msra.mxu0 0.0
  %282 = vmatpush.msra.mxu0 0.0
  %283 = vmatpush.msra.mxu0 0.0
  %284 = vmatpush.msra.mxu0 0.0
  %285 = vmatpush.msra.mxu0 0.0
  %286 = vmatpush.msra.mxu0 0.0
  %287 = vmatpush.msra.mxu0 0.0
  %288 = vmatpush.msra.mxu0 0.0
  %289 = vmatpush.msra.mxu0 0.0
  %290 = vmatpush.msra.mxu0 %v81
  %291 = vmatmul.f32.gmra.mxu0 %v84
  %v292 = vpop.f32.mrf.mxu0
  %v293 = vadd.f32 0.0, %v292
  %294 = vmatmul.f32.gmra.mxu0 %v87
  %v295 = vpop.f32.mrf.mxu0
  %v296 = vadd.f32 0.0, %v295
  %297 = vmatmul.f32.gmra.mxu0 %v90
  %v298 = vpop.f32.mrf.mxu0
  %v299 = vadd.f32 0.0, %v298
  %300 = vmatmul.f32.gmra.mxu0 %v93
  %v301 = vpop.f32.mrf.mxu0
  %v302 = vadd.f32 0.0, %v301
  %303 = vmatmul.f32.gmra.mxu0 %v96
  %v304 = vpop.f32.mrf.mxu0
  %v305 = vadd.f32 0.0, %v304
  %306 = vmatmul.f32.gmra.mxu0 %v99
  %v307 = vpop.f32.mrf.mxu0
  %v308 = vadd.f32 0.0, %v307
  %309 = vmatmul.f32.gmra.mxu0 %v102
  %v310 = vpop.f32.mrf.mxu0
  %v311 = vadd.f32 0.0, %v310
  %312 = vmatmul.f32.gmra.mxu0 %v105
  %v313 = vpop.f32.mrf.mxu0
  %v314 = vadd.f32 0.0, %v313
  %315 = vmatmul.f32.gmra.mxu0 %v108
  %v316 = vpop.f32.mrf.mxu0
  %v317 = vadd.f32 0.0, %v316
  %318 = vmatmul.f32.gmra.mxu0 %v111
  %v319 = vpop.f32.mrf.mxu0
  %v320 = vadd.f32 0.0, %v319
  %321 = vmatmul.f32.gmra.mxu0 %v114
  %v322 = vpop.f32.mrf.mxu0
  %v323 = vadd.f32 0.0, %v322
  %324 = vmatmul.f32.gmra.mxu0 %v117
  %v325 = vpop.f32.mrf.mxu0
  %v326 = vadd.f32 0.0, %v325
  %327 = vmatmul.f32.gmra.mxu0 %v120
  %v328 = vpop.f32.mrf.mxu0
  %v329 = vadd.f32 0.0, %v328
  %330 = vmatmul.f32.gmra.mxu0 %v123
  %v331 = vpop.f32.mrf.mxu0
  %v332 = vadd.f32 0.0, %v331
  %333 = vmatmul.f32.gmra.mxu0 %v126
  %v334 = vpop.f32.mrf.mxu0
  %v335 = vadd.f32 0.0, %v334
  %336 = vmatmul.f32.gmra.mxu0 %v129
  %v337 = vpop.f32.mrf.mxu0
  %v338 = vadd.f32 0.0, %v337
  %339 = vmatmul.f32.gmra.mxu0 %v132
  %v340 = vpop.f32.mrf.mxu0
  %v341 = vadd.f32 0.0, %v340
  %342 = vmatmul.f32.gmra.mxu0 %v135
  %v343 = vpop.f32.mrf.mxu0
  %v344 = vadd.f32 0.0, %v343
  %345 = vmatmul.f32.gmra.mxu0 %v138
  %v346 = vpop.f32.mrf.mxu0
  %v347 = vadd.f32 0.0, %v346
  %348 = vmatmul.f32.gmra.mxu0 %v141
  %v349 = vpop.f32.mrf.mxu0
  %v350 = vadd.f32 0.0, %v349
  %351 = vmatmul.f32.gmra.mxu0 %v144
  %v352 = vpop.f32.mrf.mxu0
  %v353 = vadd.f32 0.0, %v352
  %354 = vmatmul.f32.gmra.mxu0 %v147
  %v355 = vpop.f32.mrf.mxu0
  %v356 = vadd.f32 0.0, %v355
  %357 = vmatmul.f32.gmra.mxu0 %v150
  %v358 = vpop.f32.mrf.mxu0
  %v359 = vadd.f32 0.0, %v358
  %360 = vmatmul.f32.gmra.mxu0 %v153
  %v361 = vpop.f32.mrf.mxu0
  %v362 = vadd.f32 0.0, %v361
  %363 = vmatmul.f32.gmra.mxu0 %v156
  %v364 = vpop.f32.mrf.mxu0
  %v365 = vadd.f32 0.0, %v364
  %366 = vmatmul.f32.gmra.mxu0 %v159
  %v367 = vpop.f32.mrf.mxu0
  %v368 = vadd.f32 0.0, %v367
  %369 = vmatmul.f32.gmra.mxu0 %v162
  %v370 = vpop.f32.mrf.mxu0
  %v371 = vadd.f32 0.0, %v370
  %372 = vmatmul.f32.gmra.mxu0 %v165
  %v373 = vpop.f32.mrf.mxu0
  %v374 = vadd.f32 0.0, %v373
  %375 = vmatmul.f32.gmra.mxu0 %v168
  %v376 = vpop.f32.mrf.mxu0
  %v377 = vadd.f32 0.0, %v376
  %378 = vmatmul.f32.gmra.mxu0 %v171
  %v379 = vpop.f32.mrf.mxu0
  %v380 = vadd.f32 0.0, %v379
  %381 = vmatmul.f32.gmra.mxu0 %v174
  %v382 = vpop.f32.mrf.mxu0
  %v383 = vadd.f32 0.0, %v382
  %384 = vmatmul.f32.gmra.mxu0 %v177
  %v385 = vpop.f32.mrf.mxu0
  %v386 = vadd.f32 0.0, %v385
  %387 = vmatmul.f32.gmra.mxu0 %v180
  %v388 = vpop.f32.mrf.mxu0
  %v389 = vadd.f32 0.0, %v388
  %390 = vmatmul.f32.gmra.mxu0 %v183
  %v391 = vpop.f32.mrf.mxu0
  %v392 = vadd.f32 0.0, %v391
  %393 = vmatmul.f32.gmra.mxu0 %v186
  %v394 = vpop.f32.mrf.mxu0
  %v395 = vadd.f32 0.0, %v394
  %396 = vmatmul.f32.gmra.mxu0 %v189
  %v397 = vpop.f32.mrf.mxu0
  %v398 = vadd.f32 0.0, %v397
  %399 = vmatmul.f32.gmra.mxu0 %v192
  %v400 = vpop.f32.mrf.mxu0
  %v401 = vadd.f32 0.0, %v400
  %402 = vmatmul.f32.gmra.mxu0 %v195
  %v403 = vpop.f32.mrf.mxu0
  %v404 = vadd.f32 0.0, %v403
  %405 = vmatmul.f32.gmra.mxu0 %v198
  %v406 = vpop.f32.mrf.mxu0
  %v407 = vadd.f32 0.0, %v406
  %408 = vmatmul.f32.gmra.mxu0 %v201
  %v409 = vpop.f32.mrf.mxu0
  %v410 = vadd.f32 0.0, %v409
  %411 = vmatmul.f32.gmra.mxu0 %v204
  %v412 = vpop.f32.mrf.mxu0
  %v413 = vadd.f32 0.0, %v412
  %414 = vmatmul.f32.gmra.mxu0 %v207
  %v415 = vpop.f32.mrf.mxu0
  %v416 = vadd.f32 0.0, %v415
  %417 = vmatmul.f32.gmra.mxu0 %v210
  %v418 = vpop.f32.mrf.mxu0
  %v419 = vadd.f32 0.0, %v418
  %420 = vmatmul.f32.gmra.mxu0 %v213
  %v421 = vpop.f32.mrf.mxu0
  %v422 = vadd.f32 0.0, %v421
  %423 = vmatmul.f32.gmra.mxu0 %v216
  %v424 = vpop.f32.mrf.mxu0
  %v425 = vadd.f32 0.0, %v424
  %426 = vmatmul.f32.gmra.mxu0 %v219
  %v427 = vpop.f32.mrf.mxu0
  %v428 = vadd.f32 0.0, %v427
  %429 = vmatmul.f32.gmra.mxu0 %v222
  %v430 = vpop.f32.mrf.mxu0
  %v431 = vadd.f32 0.0, %v430
  %432 = vmatmul.f32.gmra.mxu0 %v225
  %v433 = vpop.f32.mrf.mxu0
  %v434 = vadd.f32 0.0, %v433
  %435 = vmatmul.f32.gmra.mxu0 %v228
  %v436 = vpop.f32.mrf.mxu0
  %v437 = vadd.f32 0.0, %v436
  %438 = vmatmul.f32.gmra.mxu0 %v231
  %v439 = vpop.f32.mrf.mxu0
  %v440 = vadd.f32 0.0, %v439
  %441 = vmatmul.f32.gmra.mxu0 %v234
  %v442 = vpop.f32.mrf.mxu0
  %v443 = vadd.f32 0.0, %v442
  %444 = vmatmul.f32.gmra.mxu0 %v237
  %v445 = vpop.f32.mrf.mxu0
  %v446 = vadd.f32 0.0, %v445
  %447 = vmatmul.f32.gmra.mxu0 %v240
  %v448 = vpop.f32.mrf.mxu0
  %v449 = vadd.f32 0.0, %v448
  %450 = vmatmul.f32.gmra.mxu0 %v243
  %v451 = vpop.f32.mrf.mxu0
  %v452 = vadd.f32 0.0, %v451
  %453 = vmatmul.f32.gmra.mxu0 %v246
  %v454 = vpop.f32.mrf.mxu0
  %v455 = vadd.f32 0.0, %v454
  %456 = vmatmul.f32.gmra.mxu0 %v249
  %v457 = vpop.f32.mrf.mxu0
  %v458 = vadd.f32 0.0, %v457
  %459 = vmatmul.f32.gmra.mxu0 %v252
  %v460 = vpop.f32.mrf.mxu0
  %v461 = vadd.f32 0.0, %v460
  %462 = vmatmul.f32.gmra.mxu0 %v255
  %v463 = vpop.f32.mrf.mxu0
  %v464 = vadd.f32 0.0, %v463
  %465 = vmatmul.f32.gmra.mxu0 %v258
  %v466 = vpop.f32.mrf.mxu0
  %v467 = vadd.f32 0.0, %v466
  %468 = vmatmul.f32.gmra.mxu0 %v261
  %v469 = vpop.f32.mrf.mxu0
  %v470 = vadd.f32 0.0, %v469
  %471 = vmatmul.f32.gmra.mxu0 %v264
  %v472 = vpop.f32.mrf.mxu0
  %v473 = vadd.f32 0.0, %v472
  %474 = vmatmul.f32.gmra.mxu0 %v267
  %v475 = vpop.f32.mrf.mxu0
  %v476 = vadd.f32 0.0, %v475
  %477 = vmatmul.f32.gmra.mxu0 %v270
  %v478 = vpop.f32.mrf.mxu0
  %v479 = vadd.f32 0.0, %v478
  %480 = vmatmul.f32.gmra.mxu0 %v273
  %v481 = vpop.f32.mrf.mxu0
  %v482 = vadd.f32 0.0, %v481
  %483 = vdwg.mxu0
  %v484 = vld [vmem:[%s2] sm:$0x1]
  %v486 = vperm.slane %v484, 0
  %v488 = vmul.f32 %v293, %v486
  %v489 = vmul.f32 %v296, %v486
  %v490 = vmul.f32 %v299, %v486
  %v491 = vmul.f32 %v302, %v486
  %v492 = vmul.f32 %v305, %v486
  %v493 = vmul.f32 %v308, %v486
  %v494 = vmul.f32 %v311, %v486
  %v495 = vmul.f32 %v314, %v486
  %v496 = vmul.f32 %v317, %v486
  %v497 = vmul.f32 %v320, %v486
  %v498 = vmul.f32 %v323, %v486
  %v499 = vmul.f32 %v326, %v486
  %v500 = vmul.f32 %v329, %v486
  %v501 = vmul.f32 %v332, %v486
  %v502 = vmul.f32 %v335, %v486
  %v503 = vmul.f32 %v338, %v486
  %v504 = vmul.f32 %v341, %v486
  %v505 = vmul.f32 %v344, %v486
  %v506 = vmul.f32 %v347, %v486
  %v507 = vmul.f32 %v350, %v486
  %v508 = vmul.f32 %v353, %v486
  %v509 = vmul.f32 %v356, %v486
  %v510 = vmul.f32 %v359, %v486
  %v511 = vmul.f32 %v362, %v486
  %v512 = vmul.f32 %v365, %v486
  %v513 = vmul.f32 %v368, %v486
  %v514 = vmul.f32 %v371, %v486
  %v515 = vmul.f32 %v374, %v486
  %v516 = vmul.f32 %v377, %v486
  %v517 = vmul.f32 %v380, %v486
  %v518 = vmul.f32 %v383, %v486
  %v519 = vmul.f32 %v386, %v486
  %v520 = vmul.f32 %v389, %v486
  %v521 = vmul.f32 %v392, %v486
  %v522 = vmul.f32 %v395, %v486
  %v523 = vmul.f32 %v398, %v486
  %v524 = vmul.f32 %v401, %v486
  %v525 = vmul.f32 %v404, %v486
  %v526 = vmul.f32 %v407, %v486
  %v527 = vmul.f32 %v410, %v486
  %v528 = vmul.f32 %v413, %v486
  %v529 = vmul.f32 %v416, %v486
  %v530 = vmul.f32 %v419, %v486
  %v531 = vmul.f32 %v422, %v486
  %v532 = vmul.f32 %v425, %v486
  %v533 = vmul.f32 %v428, %v486
  %v534 = vmul.f32 %v431, %v486
  %v535 = vmul.f32 %v434, %v486
  %v536 = vmul.f32 %v437, %v486
  %v537 = vmul.f32 %v440, %v486
  %v538 = vmul.f32 %v443, %v486
  %v539 = vmul.f32 %v446, %v486
  %v540 = vmul.f32 %v449, %v486
  %v541 = vmul.f32 %v452, %v486
  %v542 = vmul.f32 %v455, %v486
  %v543 = vmul.f32 %v458, %v486
  %v544 = vmul.f32 %v461, %v486
  %v545 = vmul.f32 %v464, %v486
  %v546 = vmul.f32 %v467, %v486
  %v547 = vmul.f32 %v470, %v486
  %v548 = vmul.f32 %v473, %v486
  %v549 = vmul.f32 %v476, %v486
  %v550 = vmul.f32 %v479, %v486
  %v551 = vmul.f32 %v482, %v486
  %v552 = vld [vmem:[%s3] sm:$0x1]
  %v554 = vperm.slane %v552, 0
  %v556 = vadd.f32 %v488, %v554
  %v557 = vadd.f32 %v489, %v554
  %v558 = vadd.f32 %v490, %v554
  %v559 = vadd.f32 %v491, %v554
  %v560 = vadd.f32 %v492, %v554
  %v561 = vadd.f32 %v493, %v554
  %v562 = vadd.f32 %v494, %v554
  %v563 = vadd.f32 %v495, %v554
  %v564 = vadd.f32 %v496, %v554
  %v565 = vadd.f32 %v497, %v554
  %v566 = vadd.f32 %v498, %v554
  %v567 = vadd.f32 %v499, %v554
  %v568 = vadd.f32 %v500, %v554
  %v569 = vadd.f32 %v501, %v554
  %v570 = vadd.f32 %v502, %v554
  %v571 = vadd.f32 %v503, %v554
  %v572 = vadd.f32 %v504, %v554
  %v573 = vadd.f32 %v505, %v554
  %v574 = vadd.f32 %v506, %v554
  %v575 = vadd.f32 %v507, %v554
  %v576 = vadd.f32 %v508, %v554
  %v577 = vadd.f32 %v509, %v554
  %v578 = vadd.f32 %v510, %v554
  %v579 = vadd.f32 %v511, %v554
  %v580 = vadd.f32 %v512, %v554
  %v581 = vadd.f32 %v513, %v554
  %v582 = vadd.f32 %v514, %v554
  %v583 = vadd.f32 %v515, %v554
  %v584 = vadd.f32 %v516, %v554
  %v585 = vadd.f32 %v517, %v554
  %v586 = vadd.f32 %v518, %v554
  %v587 = vadd.f32 %v519, %v554
  %v588 = vadd.f32 %v520, %v554
  %v589 = vadd.f32 %v521, %v554
  %v590 = vadd.f32 %v522, %v554
  %v591 = vadd.f32 %v523, %v554
  %v592 = vadd.f32 %v524, %v554
  %v593 = vadd.f32 %v525, %v554
  %v594 = vadd.f32 %v526, %v554
  %v595 = vadd.f32 %v527, %v554
  %v596 = vadd.f32 %v528, %v554
  %v597 = vadd.f32 %v529, %v554
  %v598 = vadd.f32 %v530, %v554
  %v599 = vadd.f32 %v531, %v554
  %v600 = vadd.f32 %v532, %v554
  %v601 = vadd.f32 %v533, %v554
  %v602 = vadd.f32 %v534, %v554
  %v603 = vadd.f32 %v535, %v554
  %v604 = vadd.f32 %v536, %v554
  %v605 = vadd.f32 %v537, %v554
  %v606 = vadd.f32 %v538, %v554
  %v607 = vadd.f32 %v539, %v554
  %v608 = vadd.f32 %v540, %v554
  %v609 = vadd.f32 %v541, %v554
  %v610 = vadd.f32 %v542, %v554
  %v611 = vadd.f32 %v543, %v554
  %v612 = vadd.f32 %v544, %v554
  %v613 = vadd.f32 %v545, %v554
  %v614 = vadd.f32 %v546, %v554
  %v615 = vadd.f32 %v547, %v554
  %v616 = vadd.f32 %v548, %v554
  %v617 = vadd.f32 %v549, %v554
  %v618 = vadd.f32 %v550, %v554
  %v619 = vadd.f32 %v551, %v554
  %v620 = vxor.u32 %v556, 2147483648
  %v621 = vxor.u32 %v557, 2147483648
  %v622 = vxor.u32 %v558, 2147483648
  %v623 = vxor.u32 %v559, 2147483648
  %v624 = vxor.u32 %v560, 2147483648
  %v625 = vxor.u32 %v561, 2147483648
  %v626 = vxor.u32 %v562, 2147483648
  %v627 = vxor.u32 %v563, 2147483648
  %v628 = vxor.u32 %v564, 2147483648
  %v629 = vxor.u32 %v565, 2147483648
  %v630 = vxor.u32 %v566, 2147483648
  %v631 = vxor.u32 %v567, 2147483648
  %v632 = vxor.u32 %v568, 2147483648
  %v633 = vxor.u32 %v569, 2147483648
  %v634 = vxor.u32 %v570, 2147483648
  %v635 = vxor.u32 %v571, 2147483648
  %v636 = vxor.u32 %v572, 2147483648
  %v637 = vxor.u32 %v573, 2147483648
  %v638 = vxor.u32 %v574, 2147483648
  %v639 = vxor.u32 %v575, 2147483648
  %v640 = vxor.u32 %v576, 2147483648
  %v641 = vxor.u32 %v577, 2147483648
  %v642 = vxor.u32 %v578, 2147483648
  %v643 = vxor.u32 %v579, 2147483648
  %v644 = vxor.u32 %v580, 2147483648
  %v645 = vxor.u32 %v581, 2147483648
  %v646 = vxor.u32 %v582, 2147483648
  %v647 = vxor.u32 %v583, 2147483648
  %v648 = vxor.u32 %v584, 2147483648
  %v649 = vxor.u32 %v585, 2147483648
  %v650 = vxor.u32 %v586, 2147483648
  %v651 = vxor.u32 %v587, 2147483648
  %v652 = vxor.u32 %v588, 2147483648
  %v653 = vxor.u32 %v589, 2147483648
  %v654 = vxor.u32 %v590, 2147483648
  %v655 = vxor.u32 %v591, 2147483648
  %v656 = vxor.u32 %v592, 2147483648
  %v657 = vxor.u32 %v593, 2147483648
  %v658 = vxor.u32 %v594, 2147483648
  %v659 = vxor.u32 %v595, 2147483648
  %v660 = vxor.u32 %v596, 2147483648
  %v661 = vxor.u32 %v597, 2147483648
  %v662 = vxor.u32 %v598, 2147483648
  %v663 = vxor.u32 %v599, 2147483648
  %v664 = vxor.u32 %v600, 2147483648
  %v665 = vxor.u32 %v601, 2147483648
  %v666 = vxor.u32 %v602, 2147483648
  %v667 = vxor.u32 %v603, 2147483648
  %v668 = vxor.u32 %v604, 2147483648
  %v669 = vxor.u32 %v605, 2147483648
  %v670 = vxor.u32 %v606, 2147483648
  %v671 = vxor.u32 %v607, 2147483648
  %v672 = vxor.u32 %v608, 2147483648
  %v673 = vxor.u32 %v609, 2147483648
  %v674 = vxor.u32 %v610, 2147483648
  %v675 = vxor.u32 %v611, 2147483648
  %v676 = vxor.u32 %v612, 2147483648
  %v677 = vxor.u32 %v613, 2147483648
  %v678 = vxor.u32 %v614, 2147483648
  %v679 = vxor.u32 %v615, 2147483648
  %v680 = vxor.u32 %v616, 2147483648
  %v681 = vxor.u32 %v617, 2147483648
  %v682 = vxor.u32 %v618, 2147483648
  %v683 = vxor.u32 %v619, 2147483648
  %v684 = vmul.f32 %v620, 1.442695
  %v685 = vpow.pop %v684
  %v686 = vmul.f32 %v621, 1.442695
  %v687 = vpow.pop %v686
  %v688 = vmul.f32 %v622, 1.442695
  %v689 = vpow.pop %v688
  %v690 = vmul.f32 %v623, 1.442695
  %v691 = vpow.pop %v690
  %v692 = vmul.f32 %v624, 1.442695
  %v693 = vpow.pop %v692
  %v694 = vmul.f32 %v625, 1.442695
  %v695 = vpow.pop %v694
  %v696 = vmul.f32 %v626, 1.442695
  %v697 = vpow.pop %v696
  %v698 = vmul.f32 %v627, 1.442695
  %v699 = vpow.pop %v698
  %v700 = vmul.f32 %v628, 1.442695
  %v701 = vpow.pop %v700
  %v702 = vmul.f32 %v629, 1.442695
  %v703 = vpow.pop %v702
  %v704 = vmul.f32 %v630, 1.442695
  %v705 = vpow.pop %v704
  %v706 = vmul.f32 %v631, 1.442695
  %v707 = vpow.pop %v706
  %v708 = vmul.f32 %v632, 1.442695
  %v709 = vpow.pop %v708
  %v710 = vmul.f32 %v633, 1.442695
  %v711 = vpow.pop %v710
  %v712 = vmul.f32 %v634, 1.442695
  %v713 = vpow.pop %v712
  %v714 = vmul.f32 %v635, 1.442695
  %v715 = vpow.pop %v714
  %v716 = vmul.f32 %v636, 1.442695
  %v717 = vpow.pop %v716
  %v718 = vmul.f32 %v637, 1.442695
  %v719 = vpow.pop %v718
  %v720 = vmul.f32 %v638, 1.442695
  %v721 = vpow.pop %v720
  %v722 = vmul.f32 %v639, 1.442695
  %v723 = vpow.pop %v722
  %v724 = vmul.f32 %v640, 1.442695
  %v725 = vpow.pop %v724
  %v726 = vmul.f32 %v641, 1.442695
  %v727 = vpow.pop %v726
  %v728 = vmul.f32 %v642, 1.442695
  %v729 = vpow.pop %v728
  %v730 = vmul.f32 %v643, 1.442695
  %v731 = vpow.pop %v730
  %v732 = vmul.f32 %v644, 1.442695
  %v733 = vpow.pop %v732
  %v734 = vmul.f32 %v645, 1.442695
  %v735 = vpow.pop %v734
  %v736 = vmul.f32 %v646, 1.442695
  %v737 = vpow.pop %v736
  %v738 = vmul.f32 %v647, 1.442695
  %v739 = vpow.pop %v738
  %v740 = vmul.f32 %v648, 1.442695
  %v741 = vpow.pop %v740
  %v742 = vmul.f32 %v649, 1.442695
  %v743 = vpow.pop %v742
  %v744 = vmul.f32 %v650, 1.442695
  %v745 = vpow.pop %v744
  %v746 = vmul.f32 %v651, 1.442695
  %v747 = vpow.pop %v746
  %v748 = vmul.f32 %v652, 1.442695
  %v749 = vpow.pop %v748
  %v750 = vmul.f32 %v653, 1.442695
  %v751 = vpow.pop %v750
  %v752 = vmul.f32 %v654, 1.442695
  %v753 = vpow.pop %v752
  %v754 = vmul.f32 %v655, 1.442695
  %v755 = vpow.pop %v754
  %v756 = vmul.f32 %v656, 1.442695
  %v757 = vpow.pop %v756
  %v758 = vmul.f32 %v657, 1.442695
  %v759 = vpow.pop %v758
  %v760 = vmul.f32 %v658, 1.442695
  %v761 = vpow.pop %v760
  %v762 = vmul.f32 %v659, 1.442695
  %v763 = vpow.pop %v762
  %v764 = vmul.f32 %v660, 1.442695
  %v765 = vpow.pop %v764
  %v766 = vmul.f32 %v661, 1.442695
  %v767 = vpow.pop %v766
  %v768 = vmul.f32 %v662, 1.442695
  %v769 = vpow.pop %v768
  %v770 = vmul.f32 %v663, 1.442695
  %v771 = vpow.pop %v770
  %v772 = vmul.f32 %v664, 1.442695
  %v773 = vpow.pop %v772
  %v774 = vmul.f32 %v665, 1.442695
  %v775 = vpow.pop %v774
  %v776 = vmul.f32 %v666, 1.442695
  %v777 = vpow.pop %v776
  %v778 = vmul.f32 %v667, 1.442695
  %v779 = vpow.pop %v778
  %v780 = vmul.f32 %v668, 1.442695
  %v781 = vpow.pop %v780
  %v782 = vmul.f32 %v669, 1.442695
  %v783 = vpow.pop %v782
  %v784 = vmul.f32 %v670, 1.442695
  %v785 = vpow.pop %v784
  %v786 = vmul.f32 %v671, 1.442695
  %v787 = vpow.pop %v786
  %v788 = vmul.f32 %v672, 1.442695
  %v789 = vpow.pop %v788
  %v790 = vmul.f32 %v673, 1.442695
  %v791 = vpow.pop %v790
  %v792 = vmul.f32 %v674, 1.442695
  %v793 = vpow.pop %v792
  %v794 = vmul.f32 %v675, 1.442695
  %v795 = vpow.pop %v794
  %v796 = vmul.f32 %v676, 1.442695
  %v797 = vpow.pop %v796
  %v798 = vmul.f32 %v677, 1.442695
  %v799 = vpow.pop %v798
  %v800 = vmul.f32 %v678, 1.442695
  %v801 = vpow.pop %v800
  %v802 = vmul.f32 %v679, 1.442695
  %v803 = vpow.pop %v802
  %v804 = vmul.f32 %v680, 1.442695
  %v805 = vpow.pop %v804
  %v806 = vmul.f32 %v681, 1.442695
  %v807 = vpow.pop %v806
  %v808 = vmul.f32 %v682, 1.442695
  %v809 = vpow.pop %v808
  %v810 = vmul.f32 %v683, 1.442695
  %v811 = vpow.pop %v810
  %v812 = vadd.f32 %v685, 1.0
  %v813 = vadd.f32 %v687, 1.0
  %v814 = vadd.f32 %v689, 1.0
  %v815 = vadd.f32 %v691, 1.0
  %v816 = vadd.f32 %v693, 1.0
  %v817 = vadd.f32 %v695, 1.0
  %v818 = vadd.f32 %v697, 1.0
  %v819 = vadd.f32 %v699, 1.0
  %v820 = vadd.f32 %v701, 1.0
  %v821 = vadd.f32 %v703, 1.0
  %v822 = vadd.f32 %v705, 1.0
  %v823 = vadd.f32 %v707, 1.0
  %v824 = vadd.f32 %v709, 1.0
  %v825 = vadd.f32 %v711, 1.0
  %v826 = vadd.f32 %v713, 1.0
  %v827 = vadd.f32 %v715, 1.0
  %v828 = vadd.f32 %v717, 1.0
  %v829 = vadd.f32 %v719, 1.0
  %v830 = vadd.f32 %v721, 1.0
  %v831 = vadd.f32 %v723, 1.0
  %v832 = vadd.f32 %v725, 1.0
  %v833 = vadd.f32 %v727, 1.0
  %v834 = vadd.f32 %v729, 1.0
  %v835 = vadd.f32 %v731, 1.0
  %v836 = vadd.f32 %v733, 1.0
  %v837 = vadd.f32 %v735, 1.0
  %v838 = vadd.f32 %v737, 1.0
  %v839 = vadd.f32 %v739, 1.0
  %v840 = vadd.f32 %v741, 1.0
  %v841 = vadd.f32 %v743, 1.0
  %v842 = vadd.f32 %v745, 1.0
  %v843 = vadd.f32 %v747, 1.0
  %v844 = vadd.f32 %v749, 1.0
  %v845 = vadd.f32 %v751, 1.0
  %v846 = vadd.f32 %v753, 1.0
  %v847 = vadd.f32 %v755, 1.0
  %v848 = vadd.f32 %v757, 1.0
  %v849 = vadd.f32 %v759, 1.0
  %v850 = vadd.f32 %v761, 1.0
  %v851 = vadd.f32 %v763, 1.0
  %v852 = vadd.f32 %v765, 1.0
  %v853 = vadd.f32 %v767, 1.0
  %v854 = vadd.f32 %v769, 1.0
  %v855 = vadd.f32 %v771, 1.0
  %v856 = vadd.f32 %v773, 1.0
  %v857 = vadd.f32 %v775, 1.0
  %v858 = vadd.f32 %v777, 1.0
  %v859 = vadd.f32 %v779, 1.0
  %v860 = vadd.f32 %v781, 1.0
  %v861 = vadd.f32 %v783, 1.0
  %v862 = vadd.f32 %v785, 1.0
  %v863 = vadd.f32 %v787, 1.0
  %v864 = vadd.f32 %v789, 1.0
  %v865 = vadd.f32 %v791, 1.0
  %v866 = vadd.f32 %v793, 1.0
  %v867 = vadd.f32 %v795, 1.0
  %v868 = vadd.f32 %v797, 1.0
  %v869 = vadd.f32 %v799, 1.0
  %v870 = vadd.f32 %v801, 1.0
  %v871 = vadd.f32 %v803, 1.0
  %v872 = vadd.f32 %v805, 1.0
  %v873 = vadd.f32 %v807, 1.0
  %v874 = vadd.f32 %v809, 1.0
  %v875 = vadd.f32 %v811, 1.0
  %v876 = vrcp.pop %v812
  %v877 = vmul.f32 %v812, %v876
  %v878 = vsub.f32 1.0, %v877
  %v879 = vmul.f32 %v876, %v878
  %v880 = vadd.f32 %v876, %v879
  %vm881 = vweird.f32 %v812
  %vm882 = vweird.f32 %v876
  %vm883 = vmor %vm881, %vm882
  %v884 = vsel %vm883, %v876, %v880
  %v885 = vand.u32 2147483647, %v812
  %vm886 = vcmp.eq.f32.partialorder %v885, 8.507059e+37
  %v887 = vand.u32 %v812, 2147483648
  %v888 = vor.u32 1.1754944e-38, %v887
  %v889 = vsel %vm886, %v888, %v884
  %v890 = vmul.f32 1.0, %v889
  %v891 = vrcp.pop %v813
  %v892 = vmul.f32 %v813, %v891
  %v893 = vsub.f32 1.0, %v892
  %v894 = vmul.f32 %v891, %v893
  %v895 = vadd.f32 %v891, %v894
  %vm896 = vweird.f32 %v813
  %vm897 = vweird.f32 %v891
  %vm898 = vmor %vm896, %vm897
  %v899 = vsel %vm898, %v891, %v895
  %v900 = vand.u32 2147483647, %v813
  %vm901 = vcmp.eq.f32.partialorder %v900, 8.507059e+37
  %v902 = vand.u32 %v813, 2147483648
  %v903 = vor.u32 1.1754944e-38, %v902
  %v904 = vsel %vm901, %v903, %v899
  %v905 = vmul.f32 1.0, %v904
  %v906 = vrcp.pop %v814
  %v907 = vmul.f32 %v814, %v906
  %v908 = vsub.f32 1.0, %v907
  %v909 = vmul.f32 %v906, %v908
  %v910 = vadd.f32 %v906, %v909
  %vm911 = vweird.f32 %v814
  %vm912 = vweird.f32 %v906
  %vm913 = vmor %vm911, %vm912
  %v914 = vsel %vm913, %v906, %v910
  %v915 = vand.u32 2147483647, %v814
  %vm916 = vcmp.eq.f32.partialorder %v915, 8.507059e+37
  %v917 = vand.u32 %v814, 2147483648
  %v918 = vor.u32 1.1754944e-38, %v917
  %v919 = vsel %vm916, %v918, %v914
  %v920 = vmul.f32 1.0, %v919
  %v921 = vrcp.pop %v815
  %v922 = vmul.f32 %v815, %v921
  %v923 = vsub.f32 1.0, %v922
  %v924 = vmul.f32 %v921, %v923
  %v925 = vadd.f32 %v921, %v924
  %vm926 = vweird.f32 %v815
  %vm927 = vweird.f32 %v921
  %vm928 = vmor %vm926, %vm927
  %v929 = vsel %vm928, %v921, %v925
  %v930 = vand.u32 2147483647, %v815
  %vm931 = vcmp.eq.f32.partialorder %v930, 8.507059e+37
  %v932 = vand.u32 %v815, 2147483648
  %v933 = vor.u32 1.1754944e-38, %v932
  %v934 = vsel %vm931, %v933, %v929
  %v935 = vmul.f32 1.0, %v934
  %v936 = vrcp.pop %v816
  %v937 = vmul.f32 %v816, %v936
  %v938 = vsub.f32 1.0, %v937
  %v939 = vmul.f32 %v936, %v938
  %v940 = vadd.f32 %v936, %v939
  %vm941 = vweird.f32 %v816
  %vm942 = vweird.f32 %v936
  %vm943 = vmor %vm941, %vm942
  %v944 = vsel %vm943, %v936, %v940
  %v945 = vand.u32 2147483647, %v816
  %vm946 = vcmp.eq.f32.partialorder %v945, 8.507059e+37
  %v947 = vand.u32 %v816, 2147483648
  %v948 = vor.u32 1.1754944e-38, %v947
  %v949 = vsel %vm946, %v948, %v944
  %v950 = vmul.f32 1.0, %v949
  %v951 = vrcp.pop %v817
  %v952 = vmul.f32 %v817, %v951
  %v953 = vsub.f32 1.0, %v952
  %v954 = vmul.f32 %v951, %v953
  %v955 = vadd.f32 %v951, %v954
  %vm956 = vweird.f32 %v817
  %vm957 = vweird.f32 %v951
  %vm958 = vmor %vm956, %vm957
  %v959 = vsel %vm958, %v951, %v955
  %v960 = vand.u32 2147483647, %v817
  %vm961 = vcmp.eq.f32.partialorder %v960, 8.507059e+37
  %v962 = vand.u32 %v817, 2147483648
  %v963 = vor.u32 1.1754944e-38, %v962
  %v964 = vsel %vm961, %v963, %v959
  %v965 = vmul.f32 1.0, %v964
  %v966 = vrcp.pop %v818
  %v967 = vmul.f32 %v818, %v966
  %v968 = vsub.f32 1.0, %v967
  %v969 = vmul.f32 %v966, %v968
  %v970 = vadd.f32 %v966, %v969
  %vm971 = vweird.f32 %v818
  %vm972 = vweird.f32 %v966
  %vm973 = vmor %vm971, %vm972
  %v974 = vsel %vm973, %v966, %v970
  %v975 = vand.u32 2147483647, %v818
  %vm976 = vcmp.eq.f32.partialorder %v975, 8.507059e+37
  %v977 = vand.u32 %v818, 2147483648
  %v978 = vor.u32 1.1754944e-38, %v977
  %v979 = vsel %vm976, %v978, %v974
  %v980 = vmul.f32 1.0, %v979
  %v981 = vrcp.pop %v819
  %v982 = vmul.f32 %v819, %v981
  %v983 = vsub.f32 1.0, %v982
  %v984 = vmul.f32 %v981, %v983
  %v985 = vadd.f32 %v981, %v984
  %vm986 = vweird.f32 %v819
  %vm987 = vweird.f32 %v981
  %vm988 = vmor %vm986, %vm987
  %v989 = vsel %vm988, %v981, %v985
  %v990 = vand.u32 2147483647, %v819
  %vm991 = vcmp.eq.f32.partialorder %v990, 8.507059e+37
  %v992 = vand.u32 %v819, 2147483648
  %v993 = vor.u32 1.1754944e-38, %v992
  %v994 = vsel %vm991, %v993, %v989
  %v995 = vmul.f32 1.0, %v994
  %v996 = vrcp.pop %v820
  %v997 = vmul.f32 %v820, %v996
  %v998 = vsub.f32 1.0, %v997
  %v999 = vmul.f32 %v996, %v998
  %v1000 = vadd.f32 %v996, %v999
  %vm1001 = vweird.f32 %v820
  %vm1002 = vweird.f32 %v996
  %vm1003 = vmor %vm1001, %vm1002
  %v1004 = vsel %vm1003, %v996, %v1000
  %v1005 = vand.u32 2147483647, %v820
  %vm1006 = vcmp.eq.f32.partialorder %v1005, 8.507059e+37
  %v1007 = vand.u32 %v820, 2147483648
  %v1008 = vor.u32 1.1754944e-38, %v1007
  %v1009 = vsel %vm1006, %v1008, %v1004
  %v1010 = vmul.f32 1.0, %v1009
  %v1011 = vrcp.pop %v821
  %v1012 = vmul.f32 %v821, %v1011
  %v1013 = vsub.f32 1.0, %v1012
  %v1014 = vmul.f32 %v1011, %v1013
  %v1015 = vadd.f32 %v1011, %v1014
  %vm1016 = vweird.f32 %v821
  %vm1017 = vweird.f32 %v1011
  %vm1018 = vmor %vm1016, %vm1017
  %v1019 = vsel %vm1018, %v1011, %v1015
  %v1020 = vand.u32 2147483647, %v821
  %vm1021 = vcmp.eq.f32.partialorder %v1020, 8.507059e+37
  %v1022 = vand.u32 %v821, 2147483648
  %v1023 = vor.u32 1.1754944e-38, %v1022
  %v1024 = vsel %vm1021, %v1023, %v1019
  %v1025 = vmul.f32 1.0, %v1024
  %v1026 = vrcp.pop %v822
  %v1027 = vmul.f32 %v822, %v1026
  %v1028 = vsub.f32 1.0, %v1027
  %v1029 = vmul.f32 %v1026, %v1028
  %v1030 = vadd.f32 %v1026, %v1029
  %vm1031 = vweird.f32 %v822
  %vm1032 = vweird.f32 %v1026
  %vm1033 = vmor %vm1031, %vm1032
  %v1034 = vsel %vm1033, %v1026, %v1030
  %v1035 = vand.u32 2147483647, %v822
  %vm1036 = vcmp.eq.f32.partialorder %v1035, 8.507059e+37
  %v1037 = vand.u32 %v822, 2147483648
  %v1038 = vor.u32 1.1754944e-38, %v1037
  %v1039 = vsel %vm1036, %v1038, %v1034
  %v1040 = vmul.f32 1.0, %v1039
  %v1041 = vrcp.pop %v823
  %v1042 = vmul.f32 %v823, %v1041
  %v1043 = vsub.f32 1.0, %v1042
  %v1044 = vmul.f32 %v1041, %v1043
  %v1045 = vadd.f32 %v1041, %v1044
  %vm1046 = vweird.f32 %v823
  %vm1047 = vweird.f32 %v1041
  %vm1048 = vmor %vm1046, %vm1047
  %v1049 = vsel %vm1048, %v1041, %v1045
  %v1050 = vand.u32 2147483647, %v823
  %vm1051 = vcmp.eq.f32.partialorder %v1050, 8.507059e+37
  %v1052 = vand.u32 %v823, 2147483648
  %v1053 = vor.u32 1.1754944e-38, %v1052
  %v1054 = vsel %vm1051, %v1053, %v1049
  %v1055 = vmul.f32 1.0, %v1054
  %v1056 = vrcp.pop %v824
  %v1057 = vmul.f32 %v824, %v1056
  %v1058 = vsub.f32 1.0, %v1057
  %v1059 = vmul.f32 %v1056, %v1058
  %v1060 = vadd.f32 %v1056, %v1059
  %vm1061 = vweird.f32 %v824
  %vm1062 = vweird.f32 %v1056
  %vm1063 = vmor %vm1061, %vm1062
  %v1064 = vsel %vm1063, %v1056, %v1060
  %v1065 = vand.u32 2147483647, %v824
  %vm1066 = vcmp.eq.f32.partialorder %v1065, 8.507059e+37
  %v1067 = vand.u32 %v824, 2147483648
  %v1068 = vor.u32 1.1754944e-38, %v1067
  %v1069 = vsel %vm1066, %v1068, %v1064
  %v1070 = vmul.f32 1.0, %v1069
  %v1071 = vrcp.pop %v825
  %v1072 = vmul.f32 %v825, %v1071
  %v1073 = vsub.f32 1.0, %v1072
  %v1074 = vmul.f32 %v1071, %v1073
  %v1075 = vadd.f32 %v1071, %v1074
  %vm1076 = vweird.f32 %v825
  %vm1077 = vweird.f32 %v1071
  %vm1078 = vmor %vm1076, %vm1077
  %v1079 = vsel %vm1078, %v1071, %v1075
  %v1080 = vand.u32 2147483647, %v825
  %vm1081 = vcmp.eq.f32.partialorder %v1080, 8.507059e+37
  %v1082 = vand.u32 %v825, 2147483648
  %v1083 = vor.u32 1.1754944e-38, %v1082
  %v1084 = vsel %vm1081, %v1083, %v1079
  %v1085 = vmul.f32 1.0, %v1084
  %v1086 = vrcp.pop %v826
  %v1087 = vmul.f32 %v826, %v1086
  %v1088 = vsub.f32 1.0, %v1087
  %v1089 = vmul.f32 %v1086, %v1088
  %v1090 = vadd.f32 %v1086, %v1089
  %vm1091 = vweird.f32 %v826
  %vm1092 = vweird.f32 %v1086
  %vm1093 = vmor %vm1091, %vm1092
  %v1094 = vsel %vm1093, %v1086, %v1090
  %v1095 = vand.u32 2147483647, %v826
  %vm1096 = vcmp.eq.f32.partialorder %v1095, 8.507059e+37
  %v1097 = vand.u32 %v826, 2147483648
  %v1098 = vor.u32 1.1754944e-38, %v1097
  %v1099 = vsel %vm1096, %v1098, %v1094
  %v1100 = vmul.f32 1.0, %v1099
  %v1101 = vrcp.pop %v827
  %v1102 = vmul.f32 %v827, %v1101
  %v1103 = vsub.f32 1.0, %v1102
  %v1104 = vmul.f32 %v1101, %v1103
  %v1105 = vadd.f32 %v1101, %v1104
  %vm1106 = vweird.f32 %v827
  %vm1107 = vweird.f32 %v1101
  %vm1108 = vmor %vm1106, %vm1107
  %v1109 = vsel %vm1108, %v1101, %v1105
  %v1110 = vand.u32 2147483647, %v827
  %vm1111 = vcmp.eq.f32.partialorder %v1110, 8.507059e+37
  %v1112 = vand.u32 %v827, 2147483648
  %v1113 = vor.u32 1.1754944e-38, %v1112
  %v1114 = vsel %vm1111, %v1113, %v1109
  %v1115 = vmul.f32 1.0, %v1114
  %v1116 = vrcp.pop %v828
  %v1117 = vmul.f32 %v828, %v1116
  %v1118 = vsub.f32 1.0, %v1117
  %v1119 = vmul.f32 %v1116, %v1118
  %v1120 = vadd.f32 %v1116, %v1119
  %vm1121 = vweird.f32 %v828
  %vm1122 = vweird.f32 %v1116
  %vm1123 = vmor %vm1121, %vm1122
  %v1124 = vsel %vm1123, %v1116, %v1120
  %v1125 = vand.u32 2147483647, %v828
  %vm1126 = vcmp.eq.f32.partialorder %v1125, 8.507059e+37
  %v1127 = vand.u32 %v828, 2147483648
  %v1128 = vor.u32 1.1754944e-38, %v1127
  %v1129 = vsel %vm1126, %v1128, %v1124
  %v1130 = vmul.f32 1.0, %v1129
  %v1131 = vrcp.pop %v829
  %v1132 = vmul.f32 %v829, %v1131
  %v1133 = vsub.f32 1.0, %v1132
  %v1134 = vmul.f32 %v1131, %v1133
  %v1135 = vadd.f32 %v1131, %v1134
  %vm1136 = vweird.f32 %v829
  %vm1137 = vweird.f32 %v1131
  %vm1138 = vmor %vm1136, %vm1137
  %v1139 = vsel %vm1138, %v1131, %v1135
  %v1140 = vand.u32 2147483647, %v829
  %vm1141 = vcmp.eq.f32.partialorder %v1140, 8.507059e+37
  %v1142 = vand.u32 %v829, 2147483648
  %v1143 = vor.u32 1.1754944e-38, %v1142
  %v1144 = vsel %vm1141, %v1143, %v1139
  %v1145 = vmul.f32 1.0, %v1144
  %v1146 = vrcp.pop %v830
  %v1147 = vmul.f32 %v830, %v1146
  %v1148 = vsub.f32 1.0, %v1147
  %v1149 = vmul.f32 %v1146, %v1148
  %v1150 = vadd.f32 %v1146, %v1149
  %vm1151 = vweird.f32 %v830
  %vm1152 = vweird.f32 %v1146
  %vm1153 = vmor %vm1151, %vm1152
  %v1154 = vsel %vm1153, %v1146, %v1150
  %v1155 = vand.u32 2147483647, %v830
  %vm1156 = vcmp.eq.f32.partialorder %v1155, 8.507059e+37
  %v1157 = vand.u32 %v830, 2147483648
  %v1158 = vor.u32 1.1754944e-38, %v1157
  %v1159 = vsel %vm1156, %v1158, %v1154
  %v1160 = vmul.f32 1.0, %v1159
  %v1161 = vrcp.pop %v831
  %v1162 = vmul.f32 %v831, %v1161
  %v1163 = vsub.f32 1.0, %v1162
  %v1164 = vmul.f32 %v1161, %v1163
  %v1165 = vadd.f32 %v1161, %v1164
  %vm1166 = vweird.f32 %v831
  %vm1167 = vweird.f32 %v1161
  %vm1168 = vmor %vm1166, %vm1167
  %v1169 = vsel %vm1168, %v1161, %v1165
  %v1170 = vand.u32 2147483647, %v831
  %vm1171 = vcmp.eq.f32.partialorder %v1170, 8.507059e+37
  %v1172 = vand.u32 %v831, 2147483648
  %v1173 = vor.u32 1.1754944e-38, %v1172
  %v1174 = vsel %vm1171, %v1173, %v1169
  %v1175 = vmul.f32 1.0, %v1174
  %v1176 = vrcp.pop %v832
  %v1177 = vmul.f32 %v832, %v1176
  %v1178 = vsub.f32 1.0, %v1177
  %v1179 = vmul.f32 %v1176, %v1178
  %v1180 = vadd.f32 %v1176, %v1179
  %vm1181 = vweird.f32 %v832
  %vm1182 = vweird.f32 %v1176
  %vm1183 = vmor %vm1181, %vm1182
  %v1184 = vsel %vm1183, %v1176, %v1180
  %v1185 = vand.u32 2147483647, %v832
  %vm1186 = vcmp.eq.f32.partialorder %v1185, 8.507059e+37
  %v1187 = vand.u32 %v832, 2147483648
  %v1188 = vor.u32 1.1754944e-38, %v1187
  %v1189 = vsel %vm1186, %v1188, %v1184
  %v1190 = vmul.f32 1.0, %v1189
  %v1191 = vrcp.pop %v833
  %v1192 = vmul.f32 %v833, %v1191
  %v1193 = vsub.f32 1.0, %v1192
  %v1194 = vmul.f32 %v1191, %v1193
  %v1195 = vadd.f32 %v1191, %v1194
  %vm1196 = vweird.f32 %v833
  %vm1197 = vweird.f32 %v1191
  %vm1198 = vmor %vm1196, %vm1197
  %v1199 = vsel %vm1198, %v1191, %v1195
  %v1200 = vand.u32 2147483647, %v833
  %vm1201 = vcmp.eq.f32.partialorder %v1200, 8.507059e+37
  %v1202 = vand.u32 %v833, 2147483648
  %v1203 = vor.u32 1.1754944e-38, %v1202
  %v1204 = vsel %vm1201, %v1203, %v1199
  %v1205 = vmul.f32 1.0, %v1204
  %v1206 = vrcp.pop %v834
  %v1207 = vmul.f32 %v834, %v1206
  %v1208 = vsub.f32 1.0, %v1207
  %v1209 = vmul.f32 %v1206, %v1208
  %v1210 = vadd.f32 %v1206, %v1209
  %vm1211 = vweird.f32 %v834
  %vm1212 = vweird.f32 %v1206
  %vm1213 = vmor %vm1211, %vm1212
  %v1214 = vsel %vm1213, %v1206, %v1210
  %v1215 = vand.u32 2147483647, %v834
  %vm1216 = vcmp.eq.f32.partialorder %v1215, 8.507059e+37
  %v1217 = vand.u32 %v834, 2147483648
  %v1218 = vor.u32 1.1754944e-38, %v1217
  %v1219 = vsel %vm1216, %v1218, %v1214
  %v1220 = vmul.f32 1.0, %v1219
  %v1221 = vrcp.pop %v835
  %v1222 = vmul.f32 %v835, %v1221
  %v1223 = vsub.f32 1.0, %v1222
  %v1224 = vmul.f32 %v1221, %v1223
  %v1225 = vadd.f32 %v1221, %v1224
  %vm1226 = vweird.f32 %v835
  %vm1227 = vweird.f32 %v1221
  %vm1228 = vmor %vm1226, %vm1227
  %v1229 = vsel %vm1228, %v1221, %v1225
  %v1230 = vand.u32 2147483647, %v835
  %vm1231 = vcmp.eq.f32.partialorder %v1230, 8.507059e+37
  %v1232 = vand.u32 %v835, 2147483648
  %v1233 = vor.u32 1.1754944e-38, %v1232
  %v1234 = vsel %vm1231, %v1233, %v1229
  %v1235 = vmul.f32 1.0, %v1234
  %v1236 = vrcp.pop %v836
  %v1237 = vmul.f32 %v836, %v1236
  %v1238 = vsub.f32 1.0, %v1237
  %v1239 = vmul.f32 %v1236, %v1238
  %v1240 = vadd.f32 %v1236, %v1239
  %vm1241 = vweird.f32 %v836
  %vm1242 = vweird.f32 %v1236
  %vm1243 = vmor %vm1241, %vm1242
  %v1244 = vsel %vm1243, %v1236, %v1240
  %v1245 = vand.u32 2147483647, %v836
  %vm1246 = vcmp.eq.f32.partialorder %v1245, 8.507059e+37
  %v1247 = vand.u32 %v836, 2147483648
  %v1248 = vor.u32 1.1754944e-38, %v1247
  %v1249 = vsel %vm1246, %v1248, %v1244
  %v1250 = vmul.f32 1.0, %v1249
  %v1251 = vrcp.pop %v837
  %v1252 = vmul.f32 %v837, %v1251
  %v1253 = vsub.f32 1.0, %v1252
  %v1254 = vmul.f32 %v1251, %v1253
  %v1255 = vadd.f32 %v1251, %v1254
  %vm1256 = vweird.f32 %v837
  %vm1257 = vweird.f32 %v1251
  %vm1258 = vmor %vm1256, %vm1257
  %v1259 = vsel %vm1258, %v1251, %v1255
  %v1260 = vand.u32 2147483647, %v837
  %vm1261 = vcmp.eq.f32.partialorder %v1260, 8.507059e+37
  %v1262 = vand.u32 %v837, 2147483648
  %v1263 = vor.u32 1.1754944e-38, %v1262
  %v1264 = vsel %vm1261, %v1263, %v1259
  %v1265 = vmul.f32 1.0, %v1264
  %v1266 = vrcp.pop %v838
  %v1267 = vmul.f32 %v838, %v1266
  %v1268 = vsub.f32 1.0, %v1267
  %v1269 = vmul.f32 %v1266, %v1268
  %v1270 = vadd.f32 %v1266, %v1269
  %vm1271 = vweird.f32 %v838
  %vm1272 = vweird.f32 %v1266
  %vm1273 = vmor %vm1271, %vm1272
  %v1274 = vsel %vm1273, %v1266, %v1270
  %v1275 = vand.u32 2147483647, %v838
  %vm1276 = vcmp.eq.f32.partialorder %v1275, 8.507059e+37
  %v1277 = vand.u32 %v838, 2147483648
  %v1278 = vor.u32 1.1754944e-38, %v1277
  %v1279 = vsel %vm1276, %v1278, %v1274
  %v1280 = vmul.f32 1.0, %v1279
  %v1281 = vrcp.pop %v839
  %v1282 = vmul.f32 %v839, %v1281
  %v1283 = vsub.f32 1.0, %v1282
  %v1284 = vmul.f32 %v1281, %v1283
  %v1285 = vadd.f32 %v1281, %v1284
  %vm1286 = vweird.f32 %v839
  %vm1287 = vweird.f32 %v1281
  %vm1288 = vmor %vm1286, %vm1287
  %v1289 = vsel %vm1288, %v1281, %v1285
  %v1290 = vand.u32 2147483647, %v839
  %vm1291 = vcmp.eq.f32.partialorder %v1290, 8.507059e+37
  %v1292 = vand.u32 %v839, 2147483648
  %v1293 = vor.u32 1.1754944e-38, %v1292
  %v1294 = vsel %vm1291, %v1293, %v1289
  %v1295 = vmul.f32 1.0, %v1294
  %v1296 = vrcp.pop %v840
  %v1297 = vmul.f32 %v840, %v1296
  %v1298 = vsub.f32 1.0, %v1297
  %v1299 = vmul.f32 %v1296, %v1298
  %v1300 = vadd.f32 %v1296, %v1299
  %vm1301 = vweird.f32 %v840
  %vm1302 = vweird.f32 %v1296
  %vm1303 = vmor %vm1301, %vm1302
  %v1304 = vsel %vm1303, %v1296, %v1300
  %v1305 = vand.u32 2147483647, %v840
  %vm1306 = vcmp.eq.f32.partialorder %v1305, 8.507059e+37
  %v1307 = vand.u32 %v840, 2147483648
  %v1308 = vor.u32 1.1754944e-38, %v1307
  %v1309 = vsel %vm1306, %v1308, %v1304
  %v1310 = vmul.f32 1.0, %v1309
  %v1311 = vrcp.pop %v841
  %v1312 = vmul.f32 %v841, %v1311
  %v1313 = vsub.f32 1.0, %v1312
  %v1314 = vmul.f32 %v1311, %v1313
  %v1315 = vadd.f32 %v1311, %v1314
  %vm1316 = vweird.f32 %v841
  %vm1317 = vweird.f32 %v1311
  %vm1318 = vmor %vm1316, %vm1317
  %v1319 = vsel %vm1318, %v1311, %v1315
  %v1320 = vand.u32 2147483647, %v841
  %vm1321 = vcmp.eq.f32.partialorder %v1320, 8.507059e+37
  %v1322 = vand.u32 %v841, 2147483648
  %v1323 = vor.u32 1.1754944e-38, %v1322
  %v1324 = vsel %vm1321, %v1323, %v1319
  %v1325 = vmul.f32 1.0, %v1324
  %v1326 = vrcp.pop %v842
  %v1327 = vmul.f32 %v842, %v1326
  %v1328 = vsub.f32 1.0, %v1327
  %v1329 = vmul.f32 %v1326, %v1328
  %v1330 = vadd.f32 %v1326, %v1329
  %vm1331 = vweird.f32 %v842
  %vm1332 = vweird.f32 %v1326
  %vm1333 = vmor %vm1331, %vm1332
  %v1334 = vsel %vm1333, %v1326, %v1330
  %v1335 = vand.u32 2147483647, %v842
  %vm1336 = vcmp.eq.f32.partialorder %v1335, 8.507059e+37
  %v1337 = vand.u32 %v842, 2147483648
  %v1338 = vor.u32 1.1754944e-38, %v1337
  %v1339 = vsel %vm1336, %v1338, %v1334
  %v1340 = vmul.f32 1.0, %v1339
  %v1341 = vrcp.pop %v843
  %v1342 = vmul.f32 %v843, %v1341
  %v1343 = vsub.f32 1.0, %v1342
  %v1344 = vmul.f32 %v1341, %v1343
  %v1345 = vadd.f32 %v1341, %v1344
  %vm1346 = vweird.f32 %v843
  %vm1347 = vweird.f32 %v1341
  %vm1348 = vmor %vm1346, %vm1347
  %v1349 = vsel %vm1348, %v1341, %v1345
  %v1350 = vand.u32 2147483647, %v843
  %vm1351 = vcmp.eq.f32.partialorder %v1350, 8.507059e+37
  %v1352 = vand.u32 %v843, 2147483648
  %v1353 = vor.u32 1.1754944e-38, %v1352
  %v1354 = vsel %vm1351, %v1353, %v1349
  %v1355 = vmul.f32 1.0, %v1354
  %v1356 = vrcp.pop %v844
  %v1357 = vmul.f32 %v844, %v1356
  %v1358 = vsub.f32 1.0, %v1357
  %v1359 = vmul.f32 %v1356, %v1358
  %v1360 = vadd.f32 %v1356, %v1359
  %vm1361 = vweird.f32 %v844
  %vm1362 = vweird.f32 %v1356
  %vm1363 = vmor %vm1361, %vm1362
  %v1364 = vsel %vm1363, %v1356, %v1360
  %v1365 = vand.u32 2147483647, %v844
  %vm1366 = vcmp.eq.f32.partialorder %v1365, 8.507059e+37
  %v1367 = vand.u32 %v844, 2147483648
  %v1368 = vor.u32 1.1754944e-38, %v1367
  %v1369 = vsel %vm1366, %v1368, %v1364
  %v1370 = vmul.f32 1.0, %v1369
  %v1371 = vrcp.pop %v845
  %v1372 = vmul.f32 %v845, %v1371
  %v1373 = vsub.f32 1.0, %v1372
  %v1374 = vmul.f32 %v1371, %v1373
  %v1375 = vadd.f32 %v1371, %v1374
  %vm1376 = vweird.f32 %v845
  %vm1377 = vweird.f32 %v1371
  %vm1378 = vmor %vm1376, %vm1377
  %v1379 = vsel %vm1378, %v1371, %v1375
  %v1380 = vand.u32 2147483647, %v845
  %vm1381 = vcmp.eq.f32.partialorder %v1380, 8.507059e+37
  %v1382 = vand.u32 %v845, 2147483648
  %v1383 = vor.u32 1.1754944e-38, %v1382
  %v1384 = vsel %vm1381, %v1383, %v1379
  %v1385 = vmul.f32 1.0, %v1384
  %v1386 = vrcp.pop %v846
  %v1387 = vmul.f32 %v846, %v1386
  %v1388 = vsub.f32 1.0, %v1387
  %v1389 = vmul.f32 %v1386, %v1388
  %v1390 = vadd.f32 %v1386, %v1389
  %vm1391 = vweird.f32 %v846
  %vm1392 = vweird.f32 %v1386
  %vm1393 = vmor %vm1391, %vm1392
  %v1394 = vsel %vm1393, %v1386, %v1390
  %v1395 = vand.u32 2147483647, %v846
  %vm1396 = vcmp.eq.f32.partialorder %v1395, 8.507059e+37
  %v1397 = vand.u32 %v846, 2147483648
  %v1398 = vor.u32 1.1754944e-38, %v1397
  %v1399 = vsel %vm1396, %v1398, %v1394
  %v1400 = vmul.f32 1.0, %v1399
  %v1401 = vrcp.pop %v847
  %v1402 = vmul.f32 %v847, %v1401
  %v1403 = vsub.f32 1.0, %v1402
  %v1404 = vmul.f32 %v1401, %v1403
  %v1405 = vadd.f32 %v1401, %v1404
  %vm1406 = vweird.f32 %v847
  %vm1407 = vweird.f32 %v1401
  %vm1408 = vmor %vm1406, %vm1407
  %v1409 = vsel %vm1408, %v1401, %v1405
  %v1410 = vand.u32 2147483647, %v847
  %vm1411 = vcmp.eq.f32.partialorder %v1410, 8.507059e+37
  %v1412 = vand.u32 %v847, 2147483648
  %v1413 = vor.u32 1.1754944e-38, %v1412
  %v1414 = vsel %vm1411, %v1413, %v1409
  %v1415 = vmul.f32 1.0, %v1414
  %v1416 = vrcp.pop %v848
  %v1417 = vmul.f32 %v848, %v1416
  %v1418 = vsub.f32 1.0, %v1417
  %v1419 = vmul.f32 %v1416, %v1418
  %v1420 = vadd.f32 %v1416, %v1419
  %vm1421 = vweird.f32 %v848
  %vm1422 = vweird.f32 %v1416
  %vm1423 = vmor %vm1421, %vm1422
  %v1424 = vsel %vm1423, %v1416, %v1420
  %v1425 = vand.u32 2147483647, %v848
  %vm1426 = vcmp.eq.f32.partialorder %v1425, 8.507059e+37
  %v1427 = vand.u32 %v848, 2147483648
  %v1428 = vor.u32 1.1754944e-38, %v1427
  %v1429 = vsel %vm1426, %v1428, %v1424
  %v1430 = vmul.f32 1.0, %v1429
  %v1431 = vrcp.pop %v849
  %v1432 = vmul.f32 %v849, %v1431
  %v1433 = vsub.f32 1.0, %v1432
  %v1434 = vmul.f32 %v1431, %v1433
  %v1435 = vadd.f32 %v1431, %v1434
  %vm1436 = vweird.f32 %v849
  %vm1437 = vweird.f32 %v1431
  %vm1438 = vmor %vm1436, %vm1437
  %v1439 = vsel %vm1438, %v1431, %v1435
  %v1440 = vand.u32 2147483647, %v849
  %vm1441 = vcmp.eq.f32.partialorder %v1440, 8.507059e+37
  %v1442 = vand.u32 %v849, 2147483648
  %v1443 = vor.u32 1.1754944e-38, %v1442
  %v1444 = vsel %vm1441, %v1443, %v1439
  %v1445 = vmul.f32 1.0, %v1444
  %v1446 = vrcp.pop %v850
  %v1447 = vmul.f32 %v850, %v1446
  %v1448 = vsub.f32 1.0, %v1447
  %v1449 = vmul.f32 %v1446, %v1448
  %v1450 = vadd.f32 %v1446, %v1449
  %vm1451 = vweird.f32 %v850
  %vm1452 = vweird.f32 %v1446
  %vm1453 = vmor %vm1451, %vm1452
  %v1454 = vsel %vm1453, %v1446, %v1450
  %v1455 = vand.u32 2147483647, %v850
  %vm1456 = vcmp.eq.f32.partialorder %v1455, 8.507059e+37
  %v1457 = vand.u32 %v850, 2147483648
  %v1458 = vor.u32 1.1754944e-38, %v1457
  %v1459 = vsel %vm1456, %v1458, %v1454
  %v1460 = vmul.f32 1.0, %v1459
  %v1461 = vrcp.pop %v851
  %v1462 = vmul.f32 %v851, %v1461
  %v1463 = vsub.f32 1.0, %v1462
  %v1464 = vmul.f32 %v1461, %v1463
  %v1465 = vadd.f32 %v1461, %v1464
  %vm1466 = vweird.f32 %v851
  %vm1467 = vweird.f32 %v1461
  %vm1468 = vmor %vm1466, %vm1467
  %v1469 = vsel %vm1468, %v1461, %v1465
  %v1470 = vand.u32 2147483647, %v851
  %vm1471 = vcmp.eq.f32.partialorder %v1470, 8.507059e+37
  %v1472 = vand.u32 %v851, 2147483648
  %v1473 = vor.u32 1.1754944e-38, %v1472
  %v1474 = vsel %vm1471, %v1473, %v1469
  %v1475 = vmul.f32 1.0, %v1474
  %v1476 = vrcp.pop %v852
  %v1477 = vmul.f32 %v852, %v1476
  %v1478 = vsub.f32 1.0, %v1477
  %v1479 = vmul.f32 %v1476, %v1478
  %v1480 = vadd.f32 %v1476, %v1479
  %vm1481 = vweird.f32 %v852
  %vm1482 = vweird.f32 %v1476
  %vm1483 = vmor %vm1481, %vm1482
  %v1484 = vsel %vm1483, %v1476, %v1480
  %v1485 = vand.u32 2147483647, %v852
  %vm1486 = vcmp.eq.f32.partialorder %v1485, 8.507059e+37
  %v1487 = vand.u32 %v852, 2147483648
  %v1488 = vor.u32 1.1754944e-38, %v1487
  %v1489 = vsel %vm1486, %v1488, %v1484
  %v1490 = vmul.f32 1.0, %v1489
  %v1491 = vrcp.pop %v853
  %v1492 = vmul.f32 %v853, %v1491
  %v1493 = vsub.f32 1.0, %v1492
  %v1494 = vmul.f32 %v1491, %v1493
  %v1495 = vadd.f32 %v1491, %v1494
  %vm1496 = vweird.f32 %v853
  %vm1497 = vweird.f32 %v1491
  %vm1498 = vmor %vm1496, %vm1497
  %v1499 = vsel %vm1498, %v1491, %v1495
  %v1500 = vand.u32 2147483647, %v853
  %vm1501 = vcmp.eq.f32.partialorder %v1500, 8.507059e+37
  %v1502 = vand.u32 %v853, 2147483648
  %v1503 = vor.u32 1.1754944e-38, %v1502
  %v1504 = vsel %vm1501, %v1503, %v1499
  %v1505 = vmul.f32 1.0, %v1504
  %v1506 = vrcp.pop %v854
  %v1507 = vmul.f32 %v854, %v1506
  %v1508 = vsub.f32 1.0, %v1507
  %v1509 = vmul.f32 %v1506, %v1508
  %v1510 = vadd.f32 %v1506, %v1509
  %vm1511 = vweird.f32 %v854
  %vm1512 = vweird.f32 %v1506
  %vm1513 = vmor %vm1511, %vm1512
  %v1514 = vsel %vm1513, %v1506, %v1510
  %v1515 = vand.u32 2147483647, %v854
  %vm1516 = vcmp.eq.f32.partialorder %v1515, 8.507059e+37
  %v1517 = vand.u32 %v854, 2147483648
  %v1518 = vor.u32 1.1754944e-38, %v1517
  %v1519 = vsel %vm1516, %v1518, %v1514
  %v1520 = vmul.f32 1.0, %v1519
  %v1521 = vrcp.pop %v855
  %v1522 = vmul.f32 %v855, %v1521
  %v1523 = vsub.f32 1.0, %v1522
  %v1524 = vmul.f32 %v1521, %v1523
  %v1525 = vadd.f32 %v1521, %v1524
  %vm1526 = vweird.f32 %v855
  %vm1527 = vweird.f32 %v1521
  %vm1528 = vmor %vm1526, %vm1527
  %v1529 = vsel %vm1528, %v1521, %v1525
  %v1530 = vand.u32 2147483647, %v855
  %vm1531 = vcmp.eq.f32.partialorder %v1530, 8.507059e+37
  %v1532 = vand.u32 %v855, 2147483648
  %v1533 = vor.u32 1.1754944e-38, %v1532
  %v1534 = vsel %vm1531, %v1533, %v1529
  %v1535 = vmul.f32 1.0, %v1534
  %v1536 = vrcp.pop %v856
  %v1537 = vmul.f32 %v856, %v1536
  %v1538 = vsub.f32 1.0, %v1537
  %v1539 = vmul.f32 %v1536, %v1538
  %v1540 = vadd.f32 %v1536, %v1539
  %vm1541 = vweird.f32 %v856
  %vm1542 = vweird.f32 %v1536
  %vm1543 = vmor %vm1541, %vm1542
  %v1544 = vsel %vm1543, %v1536, %v1540
  %v1545 = vand.u32 2147483647, %v856
  %vm1546 = vcmp.eq.f32.partialorder %v1545, 8.507059e+37
  %v1547 = vand.u32 %v856, 2147483648
  %v1548 = vor.u32 1.1754944e-38, %v1547
  %v1549 = vsel %vm1546, %v1548, %v1544
  %v1550 = vmul.f32 1.0, %v1549
  %v1551 = vrcp.pop %v857
  %v1552 = vmul.f32 %v857, %v1551
  %v1553 = vsub.f32 1.0, %v1552
  %v1554 = vmul.f32 %v1551, %v1553
  %v1555 = vadd.f32 %v1551, %v1554
  %vm1556 = vweird.f32 %v857
  %vm1557 = vweird.f32 %v1551
  %vm1558 = vmor %vm1556, %vm1557
  %v1559 = vsel %vm1558, %v1551, %v1555
  %v1560 = vand.u32 2147483647, %v857
  %vm1561 = vcmp.eq.f32.partialorder %v1560, 8.507059e+37
  %v1562 = vand.u32 %v857, 2147483648
  %v1563 = vor.u32 1.1754944e-38, %v1562
  %v1564 = vsel %vm1561, %v1563, %v1559
  %v1565 = vmul.f32 1.0, %v1564
  %v1566 = vrcp.pop %v858
  %v1567 = vmul.f32 %v858, %v1566
  %v1568 = vsub.f32 1.0, %v1567
  %v1569 = vmul.f32 %v1566, %v1568
  %v1570 = vadd.f32 %v1566, %v1569
  %vm1571 = vweird.f32 %v858
  %vm1572 = vweird.f32 %v1566
  %vm1573 = vmor %vm1571, %vm1572
  %v1574 = vsel %vm1573, %v1566, %v1570
  %v1575 = vand.u32 2147483647, %v858
  %vm1576 = vcmp.eq.f32.partialorder %v1575, 8.507059e+37
  %v1577 = vand.u32 %v858, 2147483648
  %v1578 = vor.u32 1.1754944e-38, %v1577
  %v1579 = vsel %vm1576, %v1578, %v1574
  %v1580 = vmul.f32 1.0, %v1579
  %v1581 = vrcp.pop %v859
  %v1582 = vmul.f32 %v859, %v1581
  %v1583 = vsub.f32 1.0, %v1582
  %v1584 = vmul.f32 %v1581, %v1583
  %v1585 = vadd.f32 %v1581, %v1584
  %vm1586 = vweird.f32 %v859
  %vm1587 = vweird.f32 %v1581
  %vm1588 = vmor %vm1586, %vm1587
  %v1589 = vsel %vm1588, %v1581, %v1585
  %v1590 = vand.u32 2147483647, %v859
  %vm1591 = vcmp.eq.f32.partialorder %v1590, 8.507059e+37
  %v1592 = vand.u32 %v859, 2147483648
  %v1593 = vor.u32 1.1754944e-38, %v1592
  %v1594 = vsel %vm1591, %v1593, %v1589
  %v1595 = vmul.f32 1.0, %v1594
  %v1596 = vrcp.pop %v860
  %v1597 = vmul.f32 %v860, %v1596
  %v1598 = vsub.f32 1.0, %v1597
  %v1599 = vmul.f32 %v1596, %v1598
  %v1600 = vadd.f32 %v1596, %v1599
  %vm1601 = vweird.f32 %v860
  %vm1602 = vweird.f32 %v1596
  %vm1603 = vmor %vm1601, %vm1602
  %v1604 = vsel %vm1603, %v1596, %v1600
  %v1605 = vand.u32 2147483647, %v860
  %vm1606 = vcmp.eq.f32.partialorder %v1605, 8.507059e+37
  %v1607 = vand.u32 %v860, 2147483648
  %v1608 = vor.u32 1.1754944e-38, %v1607
  %v1609 = vsel %vm1606, %v1608, %v1604
  %v1610 = vmul.f32 1.0, %v1609
  %v1611 = vrcp.pop %v861
  %v1612 = vmul.f32 %v861, %v1611
  %v1613 = vsub.f32 1.0, %v1612
  %v1614 = vmul.f32 %v1611, %v1613
  %v1615 = vadd.f32 %v1611, %v1614
  %vm1616 = vweird.f32 %v861
  %vm1617 = vweird.f32 %v1611
  %vm1618 = vmor %vm1616, %vm1617
  %v1619 = vsel %vm1618, %v1611, %v1615
  %v1620 = vand.u32 2147483647, %v861
  %vm1621 = vcmp.eq.f32.partialorder %v1620, 8.507059e+37
  %v1622 = vand.u32 %v861, 2147483648
  %v1623 = vor.u32 1.1754944e-38, %v1622
  %v1624 = vsel %vm1621, %v1623, %v1619
  %v1625 = vmul.f32 1.0, %v1624
  %v1626 = vrcp.pop %v862
  %v1627 = vmul.f32 %v862, %v1626
  %v1628 = vsub.f32 1.0, %v1627
  %v1629 = vmul.f32 %v1626, %v1628
  %v1630 = vadd.f32 %v1626, %v1629
  %vm1631 = vweird.f32 %v862
  %vm1632 = vweird.f32 %v1626
  %vm1633 = vmor %vm1631, %vm1632
  %v1634 = vsel %vm1633, %v1626, %v1630
  %v1635 = vand.u32 2147483647, %v862
  %vm1636 = vcmp.eq.f32.partialorder %v1635, 8.507059e+37
  %v1637 = vand.u32 %v862, 2147483648
  %v1638 = vor.u32 1.1754944e-38, %v1637
  %v1639 = vsel %vm1636, %v1638, %v1634
  %v1640 = vmul.f32 1.0, %v1639
  %v1641 = vrcp.pop %v863
  %v1642 = vmul.f32 %v863, %v1641
  %v1643 = vsub.f32 1.0, %v1642
  %v1644 = vmul.f32 %v1641, %v1643
  %v1645 = vadd.f32 %v1641, %v1644
  %vm1646 = vweird.f32 %v863
  %vm1647 = vweird.f32 %v1641
  %vm1648 = vmor %vm1646, %vm1647
  %v1649 = vsel %vm1648, %v1641, %v1645
  %v1650 = vand.u32 2147483647, %v863
  %vm1651 = vcmp.eq.f32.partialorder %v1650, 8.507059e+37
  %v1652 = vand.u32 %v863, 2147483648
  %v1653 = vor.u32 1.1754944e-38, %v1652
  %v1654 = vsel %vm1651, %v1653, %v1649
  %v1655 = vmul.f32 1.0, %v1654
  %v1656 = vrcp.pop %v864
  %v1657 = vmul.f32 %v864, %v1656
  %v1658 = vsub.f32 1.0, %v1657
  %v1659 = vmul.f32 %v1656, %v1658
  %v1660 = vadd.f32 %v1656, %v1659
  %vm1661 = vweird.f32 %v864
  %vm1662 = vweird.f32 %v1656
  %vm1663 = vmor %vm1661, %vm1662
  %v1664 = vsel %vm1663, %v1656, %v1660
  %v1665 = vand.u32 2147483647, %v864
  %vm1666 = vcmp.eq.f32.partialorder %v1665, 8.507059e+37
  %v1667 = vand.u32 %v864, 2147483648
  %v1668 = vor.u32 1.1754944e-38, %v1667
  %v1669 = vsel %vm1666, %v1668, %v1664
  %v1670 = vmul.f32 1.0, %v1669
  %v1671 = vrcp.pop %v865
  %v1672 = vmul.f32 %v865, %v1671
  %v1673 = vsub.f32 1.0, %v1672
  %v1674 = vmul.f32 %v1671, %v1673
  %v1675 = vadd.f32 %v1671, %v1674
  %vm1676 = vweird.f32 %v865
  %vm1677 = vweird.f32 %v1671
  %vm1678 = vmor %vm1676, %vm1677
  %v1679 = vsel %vm1678, %v1671, %v1675
  %v1680 = vand.u32 2147483647, %v865
  %vm1681 = vcmp.eq.f32.partialorder %v1680, 8.507059e+37
  %v1682 = vand.u32 %v865, 2147483648
  %v1683 = vor.u32 1.1754944e-38, %v1682
  %v1684 = vsel %vm1681, %v1683, %v1679
  %v1685 = vmul.f32 1.0, %v1684
  %v1686 = vrcp.pop %v866
  %v1687 = vmul.f32 %v866, %v1686
  %v1688 = vsub.f32 1.0, %v1687
  %v1689 = vmul.f32 %v1686, %v1688
  %v1690 = vadd.f32 %v1686, %v1689
  %vm1691 = vweird.f32 %v866
  %vm1692 = vweird.f32 %v1686
  %vm1693 = vmor %vm1691, %vm1692
  %v1694 = vsel %vm1693, %v1686, %v1690
  %v1695 = vand.u32 2147483647, %v866
  %vm1696 = vcmp.eq.f32.partialorder %v1695, 8.507059e+37
  %v1697 = vand.u32 %v866, 2147483648
  %v1698 = vor.u32 1.1754944e-38, %v1697
  %v1699 = vsel %vm1696, %v1698, %v1694
  %v1700 = vmul.f32 1.0, %v1699
  %v1701 = vrcp.pop %v867
  %v1702 = vmul.f32 %v867, %v1701
  %v1703 = vsub.f32 1.0, %v1702
  %v1704 = vmul.f32 %v1701, %v1703
  %v1705 = vadd.f32 %v1701, %v1704
  %vm1706 = vweird.f32 %v867
  %vm1707 = vweird.f32 %v1701
  %vm1708 = vmor %vm1706, %vm1707
  %v1709 = vsel %vm1708, %v1701, %v1705
  %v1710 = vand.u32 2147483647, %v867
  %vm1711 = vcmp.eq.f32.partialorder %v1710, 8.507059e+37
  %v1712 = vand.u32 %v867, 2147483648
  %v1713 = vor.u32 1.1754944e-38, %v1712
  %v1714 = vsel %vm1711, %v1713, %v1709
  %v1715 = vmul.f32 1.0, %v1714
  %v1716 = vrcp.pop %v868
  %v1717 = vmul.f32 %v868, %v1716
  %v1718 = vsub.f32 1.0, %v1717
  %v1719 = vmul.f32 %v1716, %v1718
  %v1720 = vadd.f32 %v1716, %v1719
  %vm1721 = vweird.f32 %v868
  %vm1722 = vweird.f32 %v1716
  %vm1723 = vmor %vm1721, %vm1722
  %v1724 = vsel %vm1723, %v1716, %v1720
  %v1725 = vand.u32 2147483647, %v868
  %vm1726 = vcmp.eq.f32.partialorder %v1725, 8.507059e+37
  %v1727 = vand.u32 %v868, 2147483648
  %v1728 = vor.u32 1.1754944e-38, %v1727
  %v1729 = vsel %vm1726, %v1728, %v1724
  %v1730 = vmul.f32 1.0, %v1729
  %v1731 = vrcp.pop %v869
  %v1732 = vmul.f32 %v869, %v1731
  %v1733 = vsub.f32 1.0, %v1732
  %v1734 = vmul.f32 %v1731, %v1733
  %v1735 = vadd.f32 %v1731, %v1734
  %vm1736 = vweird.f32 %v869
  %vm1737 = vweird.f32 %v1731
  %vm1738 = vmor %vm1736, %vm1737
  %v1739 = vsel %vm1738, %v1731, %v1735
  %v1740 = vand.u32 2147483647, %v869
  %vm1741 = vcmp.eq.f32.partialorder %v1740, 8.507059e+37
  %v1742 = vand.u32 %v869, 2147483648
  %v1743 = vor.u32 1.1754944e-38, %v1742
  %v1744 = vsel %vm1741, %v1743, %v1739
  %v1745 = vmul.f32 1.0, %v1744
  %v1746 = vrcp.pop %v870
  %v1747 = vmul.f32 %v870, %v1746
  %v1748 = vsub.f32 1.0, %v1747
  %v1749 = vmul.f32 %v1746, %v1748
  %v1750 = vadd.f32 %v1746, %v1749
  %vm1751 = vweird.f32 %v870
  %vm1752 = vweird.f32 %v1746
  %vm1753 = vmor %vm1751, %vm1752
  %v1754 = vsel %vm1753, %v1746, %v1750
  %v1755 = vand.u32 2147483647, %v870
  %vm1756 = vcmp.eq.f32.partialorder %v1755, 8.507059e+37
  %v1757 = vand.u32 %v870, 2147483648
  %v1758 = vor.u32 1.1754944e-38, %v1757
  %v1759 = vsel %vm1756, %v1758, %v1754
  %v1760 = vmul.f32 1.0, %v1759
  %v1761 = vrcp.pop %v871
  %v1762 = vmul.f32 %v871, %v1761
  %v1763 = vsub.f32 1.0, %v1762
  %v1764 = vmul.f32 %v1761, %v1763
  %v1765 = vadd.f32 %v1761, %v1764
  %vm1766 = vweird.f32 %v871
  %vm1767 = vweird.f32 %v1761
  %vm1768 = vmor %vm1766, %vm1767
  %v1769 = vsel %vm1768, %v1761, %v1765
  %v1770 = vand.u32 2147483647, %v871
  %vm1771 = vcmp.eq.f32.partialorder %v1770, 8.507059e+37
  %v1772 = vand.u32 %v871, 2147483648
  %v1773 = vor.u32 1.1754944e-38, %v1772
  %v1774 = vsel %vm1771, %v1773, %v1769
  %v1775 = vmul.f32 1.0, %v1774
  %v1776 = vrcp.pop %v872
  %v1777 = vmul.f32 %v872, %v1776
  %v1778 = vsub.f32 1.0, %v1777
  %v1779 = vmul.f32 %v1776, %v1778
  %v1780 = vadd.f32 %v1776, %v1779
  %vm1781 = vweird.f32 %v872
  %vm1782 = vweird.f32 %v1776
  %vm1783 = vmor %vm1781, %vm1782
  %v1784 = vsel %vm1783, %v1776, %v1780
  %v1785 = vand.u32 2147483647, %v872
  %vm1786 = vcmp.eq.f32.partialorder %v1785, 8.507059e+37
  %v1787 = vand.u32 %v872, 2147483648
  %v1788 = vor.u32 1.1754944e-38, %v1787
  %v1789 = vsel %vm1786, %v1788, %v1784
  %v1790 = vmul.f32 1.0, %v1789
  %v1791 = vrcp.pop %v873
  %v1792 = vmul.f32 %v873, %v1791
  %v1793 = vsub.f32 1.0, %v1792
  %v1794 = vmul.f32 %v1791, %v1793
  %v1795 = vadd.f32 %v1791, %v1794
  %vm1796 = vweird.f32 %v873
  %vm1797 = vweird.f32 %v1791
  %vm1798 = vmor %vm1796, %vm1797
  %v1799 = vsel %vm1798, %v1791, %v1795
  %v1800 = vand.u32 2147483647, %v873
  %vm1801 = vcmp.eq.f32.partialorder %v1800, 8.507059e+37
  %v1802 = vand.u32 %v873, 2147483648
  %v1803 = vor.u32 1.1754944e-38, %v1802
  %v1804 = vsel %vm1801, %v1803, %v1799
  %v1805 = vmul.f32 1.0, %v1804
  %v1806 = vrcp.pop %v874
  %v1807 = vmul.f32 %v874, %v1806
  %v1808 = vsub.f32 1.0, %v1807
  %v1809 = vmul.f32 %v1806, %v1808
  %v1810 = vadd.f32 %v1806, %v1809
  %vm1811 = vweird.f32 %v874
  %vm1812 = vweird.f32 %v1806
  %vm1813 = vmor %vm1811, %vm1812
  %v1814 = vsel %vm1813, %v1806, %v1810
  %v1815 = vand.u32 2147483647, %v874
  %vm1816 = vcmp.eq.f32.partialorder %v1815, 8.507059e+37
  %v1817 = vand.u32 %v874, 2147483648
  %v1818 = vor.u32 1.1754944e-38, %v1817
  %v1819 = vsel %vm1816, %v1818, %v1814
  %v1820 = vmul.f32 1.0, %v1819
  %v1821 = vrcp.pop %v875
  %v1822 = vmul.f32 %v875, %v1821
  %v1823 = vsub.f32 1.0, %v1822
  %v1824 = vmul.f32 %v1821, %v1823
  %v1825 = vadd.f32 %v1821, %v1824
  %vm1826 = vweird.f32 %v875
  %vm1827 = vweird.f32 %v1821
  %vm1828 = vmor %vm1826, %vm1827
  %v1829 = vsel %vm1828, %v1821, %v1825
  %v1830 = vand.u32 2147483647, %v875
  %vm1831 = vcmp.eq.f32.partialorder %v1830, 8.507059e+37
  %v1832 = vand.u32 %v875, 2147483648
  %v1833 = vor.u32 1.1754944e-38, %v1832
  %v1834 = vsel %vm1831, %v1833, %v1829
  %v1835 = vmul.f32 1.0, %v1834
  %v1836 = vmul.f32 %v556, %v890
  %v1837 = vmul.f32 %v557, %v905
  %v1838 = vmul.f32 %v558, %v920
  %v1839 = vmul.f32 %v559, %v935
  %v1840 = vmul.f32 %v560, %v950
  %v1841 = vmul.f32 %v561, %v965
  %v1842 = vmul.f32 %v562, %v980
  %v1843 = vmul.f32 %v563, %v995
  %v1844 = vmul.f32 %v564, %v1010
  %v1845 = vmul.f32 %v565, %v1025
  %v1846 = vmul.f32 %v566, %v1040
  %v1847 = vmul.f32 %v567, %v1055
  %v1848 = vmul.f32 %v568, %v1070
  %v1849 = vmul.f32 %v569, %v1085
  %v1850 = vmul.f32 %v570, %v1100
  %v1851 = vmul.f32 %v571, %v1115
  %v1852 = vmul.f32 %v572, %v1130
  %v1853 = vmul.f32 %v573, %v1145
  %v1854 = vmul.f32 %v574, %v1160
  %v1855 = vmul.f32 %v575, %v1175
  %v1856 = vmul.f32 %v576, %v1190
  %v1857 = vmul.f32 %v577, %v1205
  %v1858 = vmul.f32 %v578, %v1220
  %v1859 = vmul.f32 %v579, %v1235
  %v1860 = vmul.f32 %v580, %v1250
  %v1861 = vmul.f32 %v581, %v1265
  %v1862 = vmul.f32 %v582, %v1280
  %v1863 = vmul.f32 %v583, %v1295
  %v1864 = vmul.f32 %v584, %v1310
  %v1865 = vmul.f32 %v585, %v1325
  %v1866 = vmul.f32 %v586, %v1340
  %v1867 = vmul.f32 %v587, %v1355
  %v1868 = vmul.f32 %v588, %v1370
  %v1869 = vmul.f32 %v589, %v1385
  %v1870 = vmul.f32 %v590, %v1400
  %v1871 = vmul.f32 %v591, %v1415
  %v1872 = vmul.f32 %v592, %v1430
  %v1873 = vmul.f32 %v593, %v1445
  %v1874 = vmul.f32 %v594, %v1460
  %v1875 = vmul.f32 %v595, %v1475
  %v1876 = vmul.f32 %v596, %v1490
  %v1877 = vmul.f32 %v597, %v1505
  %v1878 = vmul.f32 %v598, %v1520
  %v1879 = vmul.f32 %v599, %v1535
  %v1880 = vmul.f32 %v600, %v1550
  %v1881 = vmul.f32 %v601, %v1565
  %v1882 = vmul.f32 %v602, %v1580
  %v1883 = vmul.f32 %v603, %v1595
  %v1884 = vmul.f32 %v604, %v1610
  %v1885 = vmul.f32 %v605, %v1625
  %v1886 = vmul.f32 %v606, %v1640
  %v1887 = vmul.f32 %v607, %v1655
  %v1888 = vmul.f32 %v608, %v1670
  %v1889 = vmul.f32 %v609, %v1685
  %v1890 = vmul.f32 %v610, %v1700
  %v1891 = vmul.f32 %v611, %v1715
  %v1892 = vmul.f32 %v612, %v1730
  %v1893 = vmul.f32 %v613, %v1745
  %v1894 = vmul.f32 %v614, %v1760
  %v1895 = vmul.f32 %v615, %v1775
  %v1896 = vmul.f32 %v616, %v1790
  %v1897 = vmul.f32 %v617, %v1805
  %v1898 = vmul.f32 %v618, %v1820
  %v1899 = vmul.f32 %v619, %v1835
  %vm1900 = vcmask 261120
  %1901 = vst.msk [vmem:[%s4] sm:$0xff] %vm1900, %v1836
  %1902 = vst.msk [vmem:[%s4 + $0x8] sm:$0xff] %vm1900, %v1837
  %1903 = vst.msk [vmem:[%s4 + $0x10] sm:$0xff] %vm1900, %v1838
  %1904 = vst.msk [vmem:[%s4 + $0x18] sm:$0xff] %vm1900, %v1839
  %1905 = vst.msk [vmem:[%s4 + $0x20] sm:$0xff] %vm1900, %v1840
  %1906 = vst.msk [vmem:[%s4 + $0x28] sm:$0xff] %vm1900, %v1841
  %1907 = vst.msk [vmem:[%s4 + $0x30] sm:$0xff] %vm1900, %v1842
  %1908 = vst.msk [vmem:[%s4 + $0x38] sm:$0xff] %vm1900, %v1843
  %1909 = vst.msk [vmem:[%s4 + $0x40] sm:$0xff] %vm1900, %v1844
  %1910 = vst.msk [vmem:[%s4 + $0x48] sm:$0xff] %vm1900, %v1845
  %1911 = vst.msk [vmem:[%s4 + $0x50] sm:$0xff] %vm1900, %v1846
  %1912 = vst.msk [vmem:[%s4 + $0x58] sm:$0xff] %vm1900, %v1847
  %1913 = vst.msk [vmem:[%s4 + $0x60] sm:$0xff] %vm1900, %v1848
  %1914 = vst.msk [vmem:[%s4 + $0x68] sm:$0xff] %vm1900, %v1849
  %1915 = vst.msk [vmem:[%s4 + $0x70] sm:$0xff] %vm1900, %v1850
  %1916 = vst.msk [vmem:[%s4 + $0x78] sm:$0xff] %vm1900, %v1851
  %1917 = vst.msk [vmem:[%s4 + $0x80] sm:$0xff] %vm1900, %v1852
  %1918 = vst.msk [vmem:[%s4 + $0x88] sm:$0xff] %vm1900, %v1853
  %1919 = vst.msk [vmem:[%s4 + $0x90] sm:$0xff] %vm1900, %v1854
  %1920 = vst.msk [vmem:[%s4 + $0x98] sm:$0xff] %vm1900, %v1855
  %1921 = vst.msk [vmem:[%s4 + $0xa0] sm:$0xff] %vm1900, %v1856
  %1922 = vst.msk [vmem:[%s4 + $0xa8] sm:$0xff] %vm1900, %v1857
  %1923 = vst.msk [vmem:[%s4 + $0xb0] sm:$0xff] %vm1900, %v1858
  %1924 = vst.msk [vmem:[%s4 + $0xb8] sm:$0xff] %vm1900, %v1859
  %1925 = vst.msk [vmem:[%s4 + $0xc0] sm:$0xff] %vm1900, %v1860
  %1926 = vst.msk [vmem:[%s4 + $0xc8] sm:$0xff] %vm1900, %v1861
  %1927 = vst.msk [vmem:[%s4 + $0xd0] sm:$0xff] %vm1900, %v1862
  %1928 = vst.msk [vmem:[%s4 + $0xd8] sm:$0xff] %vm1900, %v1863
  %1929 = vst.msk [vmem:[%s4 + $0xe0] sm:$0xff] %vm1900, %v1864
  %1930 = vst.msk [vmem:[%s4 + $0xe8] sm:$0xff] %vm1900, %v1865
  %1931 = vst.msk [vmem:[%s4 + $0xf0] sm:$0xff] %vm1900, %v1866
  %1932 = vst.msk [vmem:[%s4 + $0xf8] sm:$0xff] %vm1900, %v1867
  %1933 = vst.msk [vmem:[%s4 + $0x100] sm:$0xff] %vm1900, %v1868
  %1934 = vst.msk [vmem:[%s4 + $0x108] sm:$0xff] %vm1900, %v1869
  %1935 = vst.msk [vmem:[%s4 + $0x110] sm:$0xff] %vm1900, %v1870
  %1936 = vst.msk [vmem:[%s4 + $0x118] sm:$0xff] %vm1900, %v1871
  %1937 = vst.msk [vmem:[%s4 + $0x120] sm:$0xff] %vm1900, %v1872
  %1938 = vst.msk [vmem:[%s4 + $0x128] sm:$0xff] %vm1900, %v1873
  %1939 = vst.msk [vmem:[%s4 + $0x130] sm:$0xff] %vm1900, %v1874
  %1940 = vst.msk [vmem:[%s4 + $0x138] sm:$0xff] %vm1900, %v1875
  %1941 = vst.msk [vmem:[%s4 + $0x140] sm:$0xff] %vm1900, %v1876
  %1942 = vst.msk [vmem:[%s4 + $0x148] sm:$0xff] %vm1900, %v1877
  %1943 = vst.msk [vmem:[%s4 + $0x150] sm:$0xff] %vm1900, %v1878
  %1944 = vst.msk [vmem:[%s4 + $0x158] sm:$0xff] %vm1900, %v1879
  %1945 = vst.msk [vmem:[%s4 + $0x160] sm:$0xff] %vm1900, %v1880
  %1946 = vst.msk [vmem:[%s4 + $0x168] sm:$0xff] %vm1900, %v1881
  %1947 = vst.msk [vmem:[%s4 + $0x170] sm:$0xff] %vm1900, %v1882
  %1948 = vst.msk [vmem:[%s4 + $0x178] sm:$0xff] %vm1900, %v1883
  %1949 = vst.msk [vmem:[%s4 + $0x180] sm:$0xff] %vm1900, %v1884
  %1950 = vst.msk [vmem:[%s4 + $0x188] sm:$0xff] %vm1900, %v1885
  %1951 = vst.msk [vmem:[%s4 + $0x190] sm:$0xff] %vm1900, %v1886
  %1952 = vst.msk [vmem:[%s4 + $0x198] sm:$0xff] %vm1900, %v1887
  %1953 = vst.msk [vmem:[%s4 + $0x1a0] sm:$0xff] %vm1900, %v1888
  %1954 = vst.msk [vmem:[%s4 + $0x1a8] sm:$0xff] %vm1900, %v1889
  %1955 = vst.msk [vmem:[%s4 + $0x1b0] sm:$0xff] %vm1900, %v1890
  %1956 = vst.msk [vmem:[%s4 + $0x1b8] sm:$0xff] %vm1900, %v1891
  %1957 = vst.msk [vmem:[%s4 + $0x1c0] sm:$0xff] %vm1900, %v1892
  %1958 = vst.msk [vmem:[%s4 + $0x1c8] sm:$0xff] %vm1900, %v1893
  %1959 = vst.msk [vmem:[%s4 + $0x1d0] sm:$0xff] %vm1900, %v1894
  %1960 = vst.msk [vmem:[%s4 + $0x1d8] sm:$0xff] %vm1900, %v1895
  %1961 = vst.msk [vmem:[%s4 + $0x1e0] sm:$0xff] %vm1900, %v1896
  %1962 = vst.msk [vmem:[%s4 + $0x1e8] sm:$0xff] %vm1900, %v1897
  %1963 = vst.msk [vmem:[%s4 + $0x1f0] sm:$0xff] %vm1900, %v1898
  %1964 = vst.msk [vmem:[%s4 + $0x1f8] sm:$0xff] %vm1900, %v1899
  // Predicated region
  $region18: #{tpu_custom_call.1} parent=0 // pred_check
    _
  $region19: #{tpu_custom_call.1} parent=0 // pred_check_branch
    %1966 = sbr.rel (0) target = $region21
  $region20: #{tpu_custom_call.1} parent=0 // pred_region
    _
  $region21: #{tpu_custom_call.1} parent=0 // pred_fallthru
    _
  // Predicated region
  $region22: #{tpu_custom_call.1} parent=0 // pred_check
    _
  $region23: #{tpu_custom_call.1} parent=0 // pred_check_branch
    %1968 = sbr.rel (0) target = $region25
  $region24: #{tpu_custom_call.1} parent=0 // pred_region
    _
  $region25: #{tpu_custom_call.1} parent=0 // pred_fallthru
    _

</llo_original>
